<compile_context>
chip_gen: v7x
topology: tpu7x:2x2x1
jax: 0.10.0
libtpu: 0.0.40
codegen_flags: <defaults>
</compile_context>

<pallas_src>
import jax
import jax.numpy as jnp
from jax import lax
from jax.experimental import pallas as pl
from jax.experimental.pallas import tpu as pltpu


# ----------------------------- kernel body -----------------------------
def _bottleneck_kernel(x_ref, xt_ref, xb_ref,
                       w1_ref, b1_ref, w2_ref, b2_ref, w3_ref, b3_ref,
                       o_ref):
    # x_ref:  (1, TH, W, Cin) row tile of the input
    # xt_ref: (1, 1,  W, Cin) row above the tile (halo), xb_ref: row below
    # o_ref:  (1, TH, W, C4) with C4 == Cin
    _, TH, W, Cin = x_ref.shape
    C1 = w1_ref.shape[1]
    C4 = w3_ref.shape[1]
    M = TH * W
    ME = (TH + 2) * W

    i = pl.program_id(1)
    is_top = i == 0
    is_bot = i == pl.num_programs(1) - 1

    # ---- stage 1: 1x1 conv (BN scale pre-folded into w1) + bias + ReLU,
    #      computed on the tile plus its 1-row halo on each side.
    x_ext = jnp.concatenate([xt_ref[0], x_ref[0], xb_ref[0]], axis=0)
    xe = x_ext.reshape(ME, Cin).astype(jnp.bfloat16)
    a1 = jnp.dot(xe, w1_ref[...], preferred_element_type=jnp.float32)
    a1 = jnp.maximum(a1 + b1_ref[...], 0.0)

    # Halo rows that fall outside the image realize the 3x3 conv's zero
    # padding: they must be exactly zero AFTER BN + ReLU.
    row = lax.broadcasted_iota(jnp.int32, (ME, 1), 0)
    kill = (is_top & (row < W)) | (is_bot & (row >= ME - W))
    a1 = jnp.where(kill, 0.0, a1).reshape(TH + 2, W, C1)

    # ---- stage 2: 3x3 conv (stride 1, pad 1) as 9 bf16 MXU matmuls.
    # The +-1 column shifts are built once with a zero column (equivalent to
    # roll + boundary mask); the per-tap row shifts are then tile-aligned
    # slices along the outer axis — no jnp.pad, no misaligned window slices.
    zcol = jnp.zeros((TH + 2, 1, C1), jnp.float32)
    a1_l = jnp.concatenate([zcol, a1[:, :W - 1, :]], axis=1)   # col w -> w-1
    a1_r = jnp.concatenate([a1[:, 1:, :], zcol], axis=1)       # col w -> w+1
    shifted = (a1_l, a1, a1_r)

    acc = jnp.zeros((M, C1), jnp.float32)
    for ky in range(3):
        for kx in range(3):
            win = shifted[kx][ky:ky + TH].reshape(M, C1).astype(jnp.bfloat16)
            acc = acc + jnp.dot(win, w2_ref[ky * 3 + kx],
                                preferred_element_type=jnp.float32)
    a2 = jnp.maximum(acc + b2_ref[...], 0.0)

    # ---- stage 3: 1x1 conv + bias + residual add + ReLU.
    t3 = jnp.dot(a2.astype(jnp.bfloat16), w3_ref[...],
                 preferred_element_type=jnp.float32)
    t3 = t3 + b3_ref[...]
    # re-read the resident input block for the identity add (Cin == C4)
    t3 = t3 + x_ref[0].reshape(M, C4).astype(jnp.float32)
    t3 = jnp.maximum(t3, 0.0)
    o_ref[0] = t3.reshape(TH, W, C4).astype(o_ref.dtype)


# ----------------------------- wrapper -----------------------------
def _pick_tile_h(H, max_tile=8):
    for th in range(min(H, max_tile), 0, -1):
        if H % th == 0:
            return th
    return H


@jax.jit
def bottleneck_nhwc(x, w1, b1, w2, b2, w3, b3):
    """x: (N,H,W,Cin) f32.  w*: bf16 with BN scale folded in.  b*: (1,C) f32."""
    N, H, W, Cin = x.shape
    C1 = w1.shape[1]
    C4 = w3.shape[1]
    assert C4 == Cin, "identity add requires in_channel == out_channel*4"
    TH = _pick_tile_h(H)
    nT = H // TH
    w2r = w2.reshape(9, C1, C1)

    tile_map = lambda n, i: (n, i, 0, 0)
    top_map = lambda n, i: (n, jnp.maximum(i * TH - 1, 0), 0, 0)
    bot_map = lambda n, i: (n, jnp.minimum((i + 1) * TH, H - 1), 0, 0)
    full2 = lambda n, i: (0, 0)
    full3 = lambda n, i: (0, 0, 0)

    return pl.pallas_call(
        _bottleneck_kernel,
        out_shape=jax.ShapeDtypeStruct((N, H, W, C4), x.dtype),
        grid_spec=pltpu.PrefetchScalarGridSpec(
            num_scalar_prefetch=0,
            grid=(N, nT),
            in_specs=[
                pl.BlockSpec((1, TH, W, Cin), tile_map),   # x row tile
                pl.BlockSpec((1, 1, W, Cin), top_map),     # halo row above
                pl.BlockSpec((1, 1, W, Cin), bot_map),     # halo row below
                pl.BlockSpec((Cin, C1), full2),            # w1 (folded, bf16)
                pl.BlockSpec((1, C1), full2),              # b1
                pl.BlockSpec((9, C1, C1), full3),          # w2 (folded, bf16)
                pl.BlockSpec((1, C1), full2),              # b2
                pl.BlockSpec((C1, C4), full2),             # w3 (folded, bf16)
                pl.BlockSpec((1, C4), full2),              # b3
            ],
            out_specs=pl.BlockSpec((1, TH, W, C4), tile_map),
        ),
        compiler_params=pltpu.CompilerParams(
            dimension_semantics=("parallel", "parallel"),
            vmem_limit_bytes=48 * 1024 * 1024),
    )(x, x, x, w1, b1, w2r, b2, w3, b3)


def fold_bn_into_conv(w, gamma, beta, mean, var, eps=1e-5):
    """Fold eval-mode BatchNorm into the preceding conv (out-channels last)."""
    scale = gamma / jnp.sqrt(var + eps)
    bias = beta - mean * scale
    return (w * scale).astype(jnp.bfloat16), bias.reshape(1, -1).astype(jnp.float32)


def prepare_params(raw, eps=1e-5):
    (w1, bn1, w2, bn2, w3, bn3) = raw
    w1f, b1 = fold_bn_into_conv(w1, *bn1, eps=eps)
    w2f, b2 = fold_bn_into_conv(w2, *bn2, eps=eps)
    w3f, b3 = fold_bn_into_conv(w3, *bn3, eps=eps)
    return (w1f, b1, w2f, b2, w3f, b3)


def bottleneck_nchw(x_nchw, raw_params):
    """PyTorch-style entry: NCHW in / NCHW out (layout glue in plain JAX)."""
    x = jnp.transpose(x_nchw, (0, 2, 3, 1))            # NCHW -> NHWC
    y = bottleneck_nhwc(x, *prepare_params(raw_params))
    return jnp.transpose(y, (0, 3, 1, 2))               # NHWC -> NCHW


# ---------------- parameter construction (deterministic) ----------------
def make_raw_params(key, in_channel, out_channel):
    c1, c4 = out_channel, out_channel * 4               # expansion = 4
    assert c4 == in_channel
    ks = jax.random.split(key, 15)

    def bn(kg, kb, km, kv, c):
        gamma = 1.0 + 0.1 * jax.random.normal(kg, (c,), jnp.float32)
        beta = 0.1 * jax.random.normal(kb, (c,), jnp.float32)
        mean = 0.1 * jax.random.normal(km, (c,), jnp.float32)
        var = jnp.abs(jax.random.normal(kv, (c,), jnp.float32)) + 1.0
        return gamma, beta, mean, var

    # Conv weights stored ready for the kernel:
    #   conv1: (Cin, C1)   conv2: (3, 3, C1, C1) [HWIO]   conv3: (C1, C4)
    # (PyTorch OIHW 1x1 weights map to these via squeeze + transpose.)
    w1 = 0.1 * jax.random.normal(ks[0], (in_channel, c1), jnp.float32)
    w2 = 0.1 * jax.random.normal(ks[1], (3, 3, c1, c1), jnp.float32)
    w3 = 0.1 * jax.random.normal(ks[2], (c1, c4), jnp.float32)
    return (w1, bn(*ks[3:7], c1), w2, bn(*ks[7:11], c1), w3, bn(*ks[11:15], c4))


# ---------------- pure-JAX reference (unfused, f32, eval-mode BN) ----------------
def reference_nchw(x_nchw, raw_params, eps=1e-5):
    (w1, bn1, w2, bn2, w3, bn3) = raw_params
    x = jnp.transpose(x_nchw, (0, 2, 3, 1))

    def bn(t, p):
        gamma, beta, mean, var = p
        return (t - mean) * (gamma / jnp.sqrt(var + eps)) + beta

    t = jnp.einsum('nhwc,co->nhwo', x, w1)
    t = jax.nn.relu(bn(t, bn1))
    t = lax.conv_general_dilated(t, w2, (1, 1), 'SAME',
                                 dimension_numbers=('NHWC', 'HWIO', 'NHWC'))
    t = jax.nn.relu(bn(t, bn2))
    t = jnp.einsum('nhwc,co->nhwo', t, w3)
    t = bn(t, bn3)
    y = jax.nn.relu(t + x)
    return jnp.transpose(y, (0, 3, 1, 2))


if __name__ == "__main__":
    key = jax.random.PRNGKey(0)
    kx, kp = jax.random.split(key)

    N, IN_C, H, W = 2, 16, 16, 16          # in_channel = 16
    OUT_C = 4                              # out_channel = 4 -> 4*expansion = 16
    x_nchw = jax.random.normal(kx, (N, IN_C, H, W), jnp.float32)
    raw_params = make_raw_params(kp, IN_C, OUT_C)

    y = bottleneck_nchw(x_nchw, raw_params)
    y = jax.block_until_ready(y)

    # correctness check against the unfused f32 reference (bf16 MXU tolerance)
    y_ref = reference_nchw(x_nchw, raw_params)
    assert y.shape == (N, IN_C, H, W)
    assert jnp.allclose(y, y_ref, atol=5e-2, rtol=5e-2)

    print("KERNEL_OK")
</pallas_src>

<mosaic_0001>
module attributes {stable_mosaic.version = 11 : i64} {
  func.func @_bottleneck_kernel(%arg0: i32, %arg1: i32, %arg2: memref<1x8x16x16xf32, #tpu.memory_space<vmem>>, %arg3: memref<1x1x16x16xf32, #tpu.memory_space<vmem>>, %arg4: memref<1x1x16x16xf32, #tpu.memory_space<vmem>>, %arg5: memref<16x4xbf16, #tpu.memory_space<vmem>>, %arg6: memref<1x4xf32, #tpu.memory_space<vmem>>, %arg7: memref<9x4x4xbf16, #tpu.memory_space<vmem>>, %arg8: memref<1x4xf32, #tpu.memory_space<vmem>>, %arg9: memref<4x16xbf16, #tpu.memory_space<vmem>>, %arg10: memref<1x16xf32, #tpu.memory_space<vmem>>, %arg11: memref<1x8x16x16xf32, #tpu.memory_space<vmem>>) attributes {dimension_semantics = [#tpu.dimension_semantics<parallel>, #tpu.dimension_semantics<parallel>], iteration_bounds = array<i64: 2, 2>, scalar_prefetch = 0 : i64, scratch_operands = 0 : i64, tpu.core_type = #tpu.core_type<tc>, window_params = [{transform_indices = @transform_0, window_bounds = array<i64: 1, 8, 16, 16>}, {transform_indices = @transform_1, window_bounds = array<i64: 1, 1, 16, 16>}, {transform_indices = @transform_2, window_bounds = array<i64: 1, 1, 16, 16>}, {pipeline_mode = #tpu.pipeline_mode<synchronous>, transform_indices = @transform_3, window_bounds = array<i64: 16, 4>}, {pipeline_mode = #tpu.pipeline_mode<synchronous>, transform_indices = @transform_4, window_bounds = array<i64: 1, 4>}, {pipeline_mode = #tpu.pipeline_mode<synchronous>, transform_indices = @transform_5, window_bounds = array<i64: 9, 4, 4>}, {pipeline_mode = #tpu.pipeline_mode<synchronous>, transform_indices = @transform_6, window_bounds = array<i64: 1, 4>}, {pipeline_mode = #tpu.pipeline_mode<synchronous>, transform_indices = @transform_7, window_bounds = array<i64: 4, 16>}, {pipeline_mode = #tpu.pipeline_mode<synchronous>, transform_indices = @transform_8, window_bounds = array<i64: 1, 16>}, {transform_indices = @transform_9, window_bounds = array<i64: 1, 8, 16, 16>}]} {
    %c0_i32 = arith.constant 0 : i32
    %0 = arith.cmpi eq, %arg1, %c0_i32 : i32
    %c1_i32 = arith.constant 1 : i32
    %1 = arith.cmpi eq, %arg1, %c1_i32 : i32
    %c0 = arith.constant 0 : index
    %c0_0 = arith.constant 0 : index
    %c0_1 = arith.constant 0 : index
    %c0_2 = arith.constant 0 : index
    %2 = vector.load %arg3[%c0, %c0_0, %c0_1, %c0_2] : memref<1x1x16x16xf32, #tpu.memory_space<vmem>>, vector<1x1x16x16xf32>
    %3 = vector.shape_cast %2 : vector<1x1x16x16xf32> to vector<1x16x16xf32>
    %c0_3 = arith.constant 0 : index
    %c0_4 = arith.constant 0 : index
    %c0_5 = arith.constant 0 : index
    %c0_6 = arith.constant 0 : index
    %4 = vector.load %arg2[%c0_3, %c0_4, %c0_5, %c0_6] : memref<1x8x16x16xf32, #tpu.memory_space<vmem>>, vector<1x8x16x16xf32>
    %5 = vector.shape_cast %4 : vector<1x8x16x16xf32> to vector<8x16x16xf32>
    %c0_7 = arith.constant 0 : index
    %c0_8 = arith.constant 0 : index
    %c0_9 = arith.constant 0 : index
    %c0_10 = arith.constant 0 : index
    %6 = vector.load %arg4[%c0_7, %c0_8, %c0_9, %c0_10] : memref<1x1x16x16xf32, #tpu.memory_space<vmem>>, vector<1x1x16x16xf32>
    %7 = vector.shape_cast %6 : vector<1x1x16x16xf32> to vector<1x16x16xf32>
    %8 = tpu.concatenate %3, %5, %7 in 0 : vector<1x16x16xf32>, vector<8x16x16xf32>, vector<1x16x16xf32> -> vector<10x16x16xf32>
    %9 = vector.shape_cast %8 : vector<10x16x16xf32> to vector<160x16xf32>
    %10 = arith.truncf %9 : vector<160x16xf32> to vector<160x16xbf16>
    %c0_11 = arith.constant 0 : index
    %c0_12 = arith.constant 0 : index
    %11 = vector.load %arg5[%c0_11, %c0_12] : memref<16x4xbf16, #tpu.memory_space<vmem>>, vector<16x4xbf16>
    %cst = arith.constant dense<0.000000e+00> : vector<160x4xf32>
    %12 = tpu.matmul %10, %11, %cst {dimension_numbers = #tpu.dot_dimension_numbers<[1], [0], [0], [1], [0, 0, 1, 1], [], []>} : vector<160x16xbf16>, vector<16x4xbf16>, vector<160x4xf32> -> vector<160x4xf32>
    %c0_13 = arith.constant 0 : index
    %c0_14 = arith.constant 0 : index
    %13 = vector.load %arg6[%c0_13, %c0_14] : memref<1x4xf32, #tpu.memory_space<vmem>>, vector<1x4xf32>
    %14 = vector.broadcast %13 : vector<1x4xf32> to vector<160x4xf32>
    %15 = arith.addf %12, %14 : vector<160x4xf32>
    %cst_15 = arith.constant 0.000000e+00 : f32
    %16 = vector.broadcast %cst_15 : f32 to vector<160x4xf32>
    %17 = arith.maximumf %15, %16 : vector<160x4xf32>
    %18 = tpu.iota {dimensions = array<i32: 0>} : vector<160x1xi32>
    %c16_i32 = arith.constant 16 : i32
    %19 = vector.broadcast %c16_i32 : i32 to vector<160x1xi32>
    %20 = arith.cmpi slt, %18, %19 : vector<160x1xi32>
    %21 = vector.broadcast %0 : i1 to vector<160x1xi1>
    %22 = arith.andi %21, %20 : vector<160x1xi1>
    %c144_i32 = arith.constant 144 : i32
    %23 = vector.broadcast %c144_i32 : i32 to vector<160x1xi32>
    %24 = arith.cmpi sge, %18, %23 : vector<160x1xi32>
    %25 = vector.broadcast %1 : i1 to vector<160x1xi1>
    %26 = arith.andi %25, %24 : vector<160x1xi1>
    %27 = arith.ori %22, %26 : vector<160x1xi1>
    %cst_16 = arith.constant 0.000000e+00 : f32
    %28 = vector.shape_cast %27 : vector<160x1xi1> to vector<160x1xi1>
    %29 = vector.broadcast %28 : vector<160x1xi1> to vector<160x4xi1>
    %30 = vector.broadcast %cst_16 : f32 to vector<160x4xf32>
    %31 = arith.select %29, %30, %17 : vector<160x4xi1>, vector<160x4xf32>
    %32 = vector.shape_cast %31 : vector<160x4xf32> to vector<10x16x4xf32>
    %cst_17 = arith.constant 0.000000e+00 : f32
    %33 = vector.broadcast %cst_17 : f32 to vector<10x1x4xf32>
    %34 = vector.extract_strided_slice %32 {offsets = [0, 0, 0], sizes = [10, 15, 4], strides = [1, 1, 1]} : vector<10x16x4xf32> to vector<10x15x4xf32>
    %35 = tpu.concatenate %33, %34 in 1 : vector<10x1x4xf32>, vector<10x15x4xf32> -> vector<10x16x4xf32>
    %36 = vector.extract_strided_slice %32 {offsets = [0, 1, 0], sizes = [10, 15, 4], strides = [1, 1, 1]} : vector<10x16x4xf32> to vector<10x15x4xf32>
    %37 = tpu.concatenate %36, %33 in 1 : vector<10x15x4xf32>, vector<10x1x4xf32> -> vector<10x16x4xf32>
    %cst_18 = arith.constant 0.000000e+00 : f32
    %38 = vector.broadcast %cst_18 : f32 to vector<128x4xf32>
    %39 = vector.extract_strided_slice %35 {offsets = [0, 0, 0], sizes = [8, 16, 4], strides = [1, 1, 1]} : vector<10x16x4xf32> to vector<8x16x4xf32>
    %40 = vector.shape_cast %39 : vector<8x16x4xf32> to vector<128x4xf32>
    %41 = arith.truncf %40 : vector<128x4xf32> to vector<128x4xbf16>
    %c0_19 = arith.constant 0 : index
    %c0_20 = arith.constant 0 : index
    %c0_21 = arith.constant 0 : index
    %42 = vector.load %arg7[%c0_19, %c0_20, %c0_21] : memref<9x4x4xbf16, #tpu.memory_space<vmem>>, vector<1x4x4xbf16>
    %43 = vector.shape_cast %42 : vector<1x4x4xbf16> to vector<4x4xbf16>
    %cst_22 = arith.constant dense<0.000000e+00> : vector<128x4xf32>
    %44 = tpu.matmul %41, %43, %cst_22 {dimension_numbers = #tpu.dot_dimension_numbers<[1], [0], [0], [1], [0, 0, 1, 1], [], []>} : vector<128x4xbf16>, vector<4x4xbf16>, vector<128x4xf32> -> vector<128x4xf32>
    %45 = arith.addf %38, %44 : vector<128x4xf32>
    %46 = vector.extract_strided_slice %32 {offsets = [0, 0, 0], sizes = [8, 16, 4], strides = [1, 1, 1]} : vector<10x16x4xf32> to vector<8x16x4xf32>
    %47 = vector.shape_cast %46 : vector<8x16x4xf32> to vector<128x4xf32>
    %48 = arith.truncf %47 : vector<128x4xf32> to vector<128x4xbf16>
    %c1 = arith.constant 1 : index
    %c0_23 = arith.constant 0 : index
    %c0_24 = arith.constant 0 : index
    %49 = vector.load %arg7[%c1, %c0_23, %c0_24] : memref<9x4x4xbf16, #tpu.memory_space<vmem>>, vector<1x4x4xbf16>
    %50 = vector.shape_cast %49 : vector<1x4x4xbf16> to vector<4x4xbf16>
    %cst_25 = arith.constant dense<0.000000e+00> : vector<128x4xf32>
    %51 = tpu.matmul %48, %50, %cst_25 {dimension_numbers = #tpu.dot_dimension_numbers<[1], [0], [0], [1], [0, 0, 1, 1], [], []>} : vector<128x4xbf16>, vector<4x4xbf16>, vector<128x4xf32> -> vector<128x4xf32>
    %52 = arith.addf %45, %51 : vector<128x4xf32>
    %53 = vector.extract_strided_slice %37 {offsets = [0, 0, 0], sizes = [8, 16, 4], strides = [1, 1, 1]} : vector<10x16x4xf32> to vector<8x16x4xf32>
    %54 = vector.shape_cast %53 : vector<8x16x4xf32> to vector<128x4xf32>
    %55 = arith.truncf %54 : vector<128x4xf32> to vector<128x4xbf16>
    %c2 = arith.constant 2 : index
    %c0_26 = arith.constant 0 : index
    %c0_27 = arith.constant 0 : index
    %56 = vector.load %arg7[%c2, %c0_26, %c0_27] : memref<9x4x4xbf16, #tpu.memory_space<vmem>>, vector<1x4x4xbf16>
    %57 = vector.shape_cast %56 : vector<1x4x4xbf16> to vector<4x4xbf16>
    %cst_28 = arith.constant dense<0.000000e+00> : vector<128x4xf32>
    %58 = tpu.matmul %55, %57, %cst_28 {dimension_numbers = #tpu.dot_dimension_numbers<[1], [0], [0], [1], [0, 0, 1, 1], [], []>} : vector<128x4xbf16>, vector<4x4xbf16>, vector<128x4xf32> -> vector<128x4xf32>
    %59 = arith.addf %52, %58 : vector<128x4xf32>
    %60 = vector.extract_strided_slice %35 {offsets = [1, 0, 0], sizes = [8, 16, 4], strides = [1, 1, 1]} : vector<10x16x4xf32> to vector<8x16x4xf32>
    %61 = vector.shape_cast %60 : vector<8x16x4xf32> to vector<128x4xf32>
    %62 = arith.truncf %61 : vector<128x4xf32> to vector<128x4xbf16>
    %c3 = arith.constant 3 : index
    %c0_29 = arith.constant 0 : index
    %c0_30 = arith.constant 0 : index
    %63 = vector.load %arg7[%c3, %c0_29, %c0_30] : memref<9x4x4xbf16, #tpu.memory_space<vmem>>, vector<1x4x4xbf16>
    %64 = vector.shape_cast %63 : vector<1x4x4xbf16> to vector<4x4xbf16>
    %cst_31 = arith.constant dense<0.000000e+00> : vector<128x4xf32>
    %65 = tpu.matmul %62, %64, %cst_31 {dimension_numbers = #tpu.dot_dimension_numbers<[1], [0], [0], [1], [0, 0, 1, 1], [], []>} : vector<128x4xbf16>, vector<4x4xbf16>, vector<128x4xf32> -> vector<128x4xf32>
    %66 = arith.addf %59, %65 : vector<128x4xf32>
    %67 = vector.extract_strided_slice %32 {offsets = [1, 0, 0], sizes = [8, 16, 4], strides = [1, 1, 1]} : vector<10x16x4xf32> to vector<8x16x4xf32>
    %68 = vector.shape_cast %67 : vector<8x16x4xf32> to vector<128x4xf32>
    %69 = arith.truncf %68 : vector<128x4xf32> to vector<128x4xbf16>
    %c4 = arith.constant 4 : index
    %c0_32 = arith.constant 0 : index
    %c0_33 = arith.constant 0 : index
    %70 = vector.load %arg7[%c4, %c0_32, %c0_33] : memref<9x4x4xbf16, #tpu.memory_space<vmem>>, vector<1x4x4xbf16>
    %71 = vector.shape_cast %70 : vector<1x4x4xbf16> to vector<4x4xbf16>
    %cst_34 = arith.constant dense<0.000000e+00> : vector<128x4xf32>
    %72 = tpu.matmul %69, %71, %cst_34 {dimension_numbers = #tpu.dot_dimension_numbers<[1], [0], [0], [1], [0, 0, 1, 1], [], []>} : vector<128x4xbf16>, vector<4x4xbf16>, vector<128x4xf32> -> vector<128x4xf32>
    %73 = arith.addf %66, %72 : vector<128x4xf32>
    %74 = vector.extract_strided_slice %37 {offsets = [1, 0, 0], sizes = [8, 16, 4], strides = [1, 1, 1]} : vector<10x16x4xf32> to vector<8x16x4xf32>
    %75 = vector.shape_cast %74 : vector<8x16x4xf32> to vector<128x4xf32>
    %76 = arith.truncf %75 : vector<128x4xf32> to vector<128x4xbf16>
    %c5 = arith.constant 5 : index
    %c0_35 = arith.constant 0 : index
    %c0_36 = arith.constant 0 : index
    %77 = vector.load %arg7[%c5, %c0_35, %c0_36] : memref<9x4x4xbf16, #tpu.memory_space<vmem>>, vector<1x4x4xbf16>
    %78 = vector.shape_cast %77 : vector<1x4x4xbf16> to vector<4x4xbf16>
    %cst_37 = arith.constant dense<0.000000e+00> : vector<128x4xf32>
    %79 = tpu.matmul %76, %78, %cst_37 {dimension_numbers = #tpu.dot_dimension_numbers<[1], [0], [0], [1], [0, 0, 1, 1], [], []>} : vector<128x4xbf16>, vector<4x4xbf16>, vector<128x4xf32> -> vector<128x4xf32>
    %80 = arith.addf %73, %79 : vector<128x4xf32>
    %81 = vector.extract_strided_slice %35 {offsets = [2, 0, 0], sizes = [8, 16, 4], strides = [1, 1, 1]} : vector<10x16x4xf32> to vector<8x16x4xf32>
    %82 = vector.shape_cast %81 : vector<8x16x4xf32> to vector<128x4xf32>
    %83 = arith.truncf %82 : vector<128x4xf32> to vector<128x4xbf16>
    %c6 = arith.constant 6 : index
    %c0_38 = arith.constant 0 : index
    %c0_39 = arith.constant 0 : index
    %84 = vector.load %arg7[%c6, %c0_38, %c0_39] : memref<9x4x4xbf16, #tpu.memory_space<vmem>>, vector<1x4x4xbf16>
    %85 = vector.shape_cast %84 : vector<1x4x4xbf16> to vector<4x4xbf16>
    %cst_40 = arith.constant dense<0.000000e+00> : vector<128x4xf32>
    %86 = tpu.matmul %83, %85, %cst_40 {dimension_numbers = #tpu.dot_dimension_numbers<[1], [0], [0], [1], [0, 0, 1, 1], [], []>} : vector<128x4xbf16>, vector<4x4xbf16>, vector<128x4xf32> -> vector<128x4xf32>
    %87 = arith.addf %80, %86 : vector<128x4xf32>
    %88 = vector.extract_strided_slice %32 {offsets = [2, 0, 0], sizes = [8, 16, 4], strides = [1, 1, 1]} : vector<10x16x4xf32> to vector<8x16x4xf32>
    %89 = vector.shape_cast %88 : vector<8x16x4xf32> to vector<128x4xf32>
    %90 = arith.truncf %89 : vector<128x4xf32> to vector<128x4xbf16>
    %c7 = arith.constant 7 : index
    %c0_41 = arith.constant 0 : index
    %c0_42 = arith.constant 0 : index
    %91 = vector.load %arg7[%c7, %c0_41, %c0_42] : memref<9x4x4xbf16, #tpu.memory_space<vmem>>, vector<1x4x4xbf16>
    %92 = vector.shape_cast %91 : vector<1x4x4xbf16> to vector<4x4xbf16>
    %cst_43 = arith.constant dense<0.000000e+00> : vector<128x4xf32>
    %93 = tpu.matmul %90, %92, %cst_43 {dimension_numbers = #tpu.dot_dimension_numbers<[1], [0], [0], [1], [0, 0, 1, 1], [], []>} : vector<128x4xbf16>, vector<4x4xbf16>, vector<128x4xf32> -> vector<128x4xf32>
    %94 = arith.addf %87, %93 : vector<128x4xf32>
    %95 = vector.extract_strided_slice %37 {offsets = [2, 0, 0], sizes = [8, 16, 4], strides = [1, 1, 1]} : vector<10x16x4xf32> to vector<8x16x4xf32>
    %96 = vector.shape_cast %95 : vector<8x16x4xf32> to vector<128x4xf32>
    %97 = arith.truncf %96 : vector<128x4xf32> to vector<128x4xbf16>
    %c8 = arith.constant 8 : index
    %c0_44 = arith.constant 0 : index
    %c0_45 = arith.constant 0 : index
    %98 = vector.load %arg7[%c8, %c0_44, %c0_45] : memref<9x4x4xbf16, #tpu.memory_space<vmem>>, vector<1x4x4xbf16>
    %99 = vector.shape_cast %98 : vector<1x4x4xbf16> to vector<4x4xbf16>
    %cst_46 = arith.constant dense<0.000000e+00> : vector<128x4xf32>
    %100 = tpu.matmul %97, %99, %cst_46 {dimension_numbers = #tpu.dot_dimension_numbers<[1], [0], [0], [1], [0, 0, 1, 1], [], []>} : vector<128x4xbf16>, vector<4x4xbf16>, vector<128x4xf32> -> vector<128x4xf32>
    %101 = arith.addf %94, %100 : vector<128x4xf32>
    %c0_47 = arith.constant 0 : index
    %c0_48 = arith.constant 0 : index
    %102 = vector.load %arg8[%c0_47, %c0_48] : memref<1x4xf32, #tpu.memory_space<vmem>>, vector<1x4xf32>
    %103 = vector.broadcast %102 : vector<1x4xf32> to vector<128x4xf32>
    %104 = arith.addf %101, %103 : vector<128x4xf32>
    %cst_49 = arith.constant 0.000000e+00 : f32
    %105 = vector.broadcast %cst_49 : f32 to vector<128x4xf32>
    %106 = arith.maximumf %104, %105 : vector<128x4xf32>
    %107 = arith.truncf %106 : vector<128x4xf32> to vector<128x4xbf16>
    %c0_50 = arith.constant 0 : index
    %c0_51 = arith.constant 0 : index
    %108 = vector.load %arg9[%c0_50, %c0_51] : memref<4x16xbf16, #tpu.memory_space<vmem>>, vector<4x16xbf16>
    %cst_52 = arith.constant dense<0.000000e+00> : vector<128x16xf32>
    %109 = tpu.matmul %107, %108, %cst_52 {dimension_numbers = #tpu.dot_dimension_numbers<[1], [0], [0], [1], [0, 0, 1, 1], [], []>} : vector<128x4xbf16>, vector<4x16xbf16>, vector<128x16xf32> -> vector<128x16xf32>
    %c0_53 = arith.constant 0 : index
    %c0_54 = arith.constant 0 : index
    %110 = vector.load %arg10[%c0_53, %c0_54] : memref<1x16xf32, #tpu.memory_space<vmem>>, vector<1x16xf32>
    %111 = vector.broadcast %110 : vector<1x16xf32> to vector<128x16xf32>
    %112 = arith.addf %109, %111 : vector<128x16xf32>
    %c0_55 = arith.constant 0 : index
    %c0_56 = arith.constant 0 : index
    %c0_57 = arith.constant 0 : index
    %c0_58 = arith.constant 0 : index
    %113 = vector.load %arg2[%c0_55, %c0_56, %c0_57, %c0_58] : memref<1x8x16x16xf32, #tpu.memory_space<vmem>>, vector<1x8x16x16xf32>
    %114 = vector.shape_cast %113 : vector<1x8x16x16xf32> to vector<8x16x16xf32>
    %115 = vector.shape_cast %114 : vector<8x16x16xf32> to vector<128x16xf32>
    %116 = arith.addf %112, %115 : vector<128x16xf32>
    %cst_59 = arith.constant 0.000000e+00 : f32
    %117 = vector.broadcast %cst_59 : f32 to vector<128x16xf32>
    %118 = arith.maximumf %116, %117 : vector<128x16xf32>
    %119 = vector.shape_cast %118 : vector<128x16xf32> to vector<8x16x16xf32>
    %c0_60 = arith.constant 0 : index
    %c0_61 = arith.constant 0 : index
    %c0_62 = arith.constant 0 : index
    %c0_63 = arith.constant 0 : index
    %120 = vector.load %arg11[%c0_60, %c0_61, %c0_62, %c0_63] : memref<1x8x16x16xf32, #tpu.memory_space<vmem>>, vector<1x8x16x16xf32>
    %121 = vector.shape_cast %120 : vector<1x8x16x16xf32> to vector<8x16x16xf32>
    %122 = vector.shape_cast %119 : vector<8x16x16xf32> to vector<1x8x16x16xf32>
    tpu.vector_store %arg11[%c0_60, %c0_61, %c0_62, %c0_63], %122 {strides = array<i32>} : memref<1x8x16x16xf32, #tpu.memory_space<vmem>>, vector<1x8x16x16xf32>,
    return
  }
  func.func @transform_0(%arg0: i32, %arg1: i32) -> (i32, i32, i32, i32) {
    %c0_i32 = arith.constant 0 : i32
    %c0_i32_0 = arith.constant 0 : i32
    %c0_i32_1 = arith.constant 0 : i32
    return %arg0, %arg1, %c0_i32, %c0_i32_0 : i32, i32, i32, i32
  }
  func.func @transform_1(%arg0: i32, %arg1: i32) -> (i32, i32, i32, i32) {
    %c8_i32 = arith.constant 8 : i32
    %0 = arith.muli %arg1, %c8_i32 : i32
    %c1_i32 = arith.constant 1 : i32
    %1 = arith.subi %0, %c1_i32 : i32
    %c0_i32 = arith.constant 0 : i32
    %2 = arith.maxsi %1, %c0_i32 : i32
    %c0_i32_0 = arith.constant 0 : i32
    %c0_i32_1 = arith.constant 0 : i32
    %c0_i32_2 = arith.constant 0 : i32
    return %arg0, %2, %c0_i32_0, %c0_i32_1 : i32, i32, i32, i32
  }
  func.func @transform_2(%arg0: i32, %arg1: i32) -> (i32, i32, i32, i32) {
    %c1_i32 = arith.constant 1 : i32
    %0 = arith.addi %arg1, %c1_i32 : i32
    %c8_i32 = arith.constant 8 : i32
    %1 = arith.muli %0, %c8_i32 : i32
    %c15_i32 = arith.constant 15 : i32
    %2 = arith.minsi %1, %c15_i32 : i32
    %c0_i32 = arith.constant 0 : i32
    %c0_i32_0 = arith.constant 0 : i32
    %c0_i32_1 = arith.constant 0 : i32
    return %arg0, %2, %c0_i32, %c0_i32_0 : i32, i32, i32, i32
  }
  func.func @transform_3(%arg0: i32, %arg1: i32) -> (i32, i32) {
    %c0_i32 = arith.constant 0 : i32
    %c0_i32_0 = arith.constant 0 : i32
    %c0_i32_1 = arith.constant 0 : i32
    return %c0_i32, %c0_i32_0 : i32, i32
  }
  func.func @transform_4(%arg0: i32, %arg1: i32) -> (i32, i32) {
    %c0_i32 = arith.constant 0 : i32
    %c0_i32_0 = arith.constant 0 : i32
    %c0_i32_1 = arith.constant 0 : i32
    return %c0_i32, %c0_i32_0 : i32, i32
  }
  func.func @transform_5(%arg0: i32, %arg1: i32) -> (i32, i32, i32) {
    %c0_i32 = arith.constant 0 : i32
    %c0_i32_0 = arith.constant 0 : i32
    %c0_i32_1 = arith.constant 0 : i32
    %c0_i32_2 = arith.constant 0 : i32
    return %c0_i32, %c0_i32_0, %c0_i32_1 : i32, i32, i32
  }
  func.func @transform_6(%arg0: i32, %arg1: i32) -> (i32, i32) {
    %c0_i32 = arith.constant 0 : i32
    %c0_i32_0 = arith.constant 0 : i32
    %c0_i32_1 = arith.constant 0 : i32
    return %c0_i32, %c0_i32_0 : i32, i32
  }
  func.func @transform_7(%arg0: i32, %arg1: i32) -> (i32, i32) {
    %c0_i32 = arith.constant 0 : i32
    %c0_i32_0 = arith.constant 0 : i32
    %c0_i32_1 = arith.constant 0 : i32
    return %c0_i32, %c0_i32_0 : i32, i32
  }
  func.func @transform_8(%arg0: i32, %arg1: i32) -> (i32, i32) {
    %c0_i32 = arith.constant 0 : i32
    %c0_i32_0 = arith.constant 0 : i32
    %c0_i32_1 = arith.constant 0 : i32
    return %c0_i32, %c0_i32_0 : i32, i32
  }
  func.func @transform_9(%arg0: i32, %arg1: i32) -> (i32, i32, i32, i32) {
    %c0_i32 = arith.constant 0 : i32
    %c0_i32_0 = arith.constant 0 : i32
    %c0_i32_1 = arith.constant 0 : i32
    return %arg0, %arg1, %c0_i32, %c0_i32_0 : i32, i32, i32, i32
  }
}

</mosaic_0001>

<llo_original>
// kernel: bottleneck_nhwc.1
$region0: #{bottleneck_nhwc.1}
  #allocation0 [shape = 'u32[]', space=smem, size = 0x4, offset = 0x4, fixed_abs, tag = 'smem constant byte address 0x4 - core index']
  #allocation1 [shape = 'u32[144,128]{1,0:T(1,128)}', space=vmem, size = 0x12000, scoped, tag = 'internal scratch']
  %s0 = inlined_call_operand.hbm [shape: f32[2,16,16,16], index: 0, kind: input, shape index: {}, may-alias: {0,1,2}]
  %s1 = inlined_call_operand.hbm [shape: f32[2,16,16,16], index: 1, kind: input, shape index: {}, may-alias: {0,1,2}]
  %s2 = inlined_call_operand.hbm [shape: f32[2,16,16,16], index: 2, kind: input, shape index: {}, may-alias: {0,1,2}]
  %s3 = inlined_call_operand.vmem [shape: bf16[16,4], index: 3, kind: input, shape index: {}]
  %s4 = inlined_call_operand.vmem [shape: f32[1,4], index: 4, kind: input, shape index: {}]
  %s5 = inlined_call_operand.vmem [shape: bf16[9,4,4], index: 5, kind: input, shape index: {}]
  %s6 = inlined_call_operand.vmem [shape: f32[1,4], index: 6, kind: input, shape index: {}]
  %s7 = inlined_call_operand.vmem [shape: bf16[4,16], index: 7, kind: input, shape index: {}]
  %s8 = inlined_call_operand.vmem [shape: f32[1,16], index: 8, kind: input, shape index: {}]
  %s9 = inlined_call_operand.hbm [shape: f32[2,16,16,16], index: 9, kind: output, shape index: {}]
  %s10 = sld [smem:[#allocation0]]
  $region81: #{bottleneck_nhwc.1} parent=0
    _
  %s12 = ssub.s32 1, %s10
  %s13 = scalar_select 0, %s12, %s10
  $region1: #{bottleneck_nhwc.1} parent=0
    #allocation2 [shape = 'u8[131072]{0}', space=vmem, size = 0x20000, scoped, tag = 'input window, operand 0']
    #allocation3 [shape = 's32[2]{0}', space=sflag, size = 0x8, scoped, tag = 'scoped memory for bottleneck_nhwc.1']
    #allocation4 [shape = 's32[2]{0}', space=sflag, size = 0x8, scoped, tag = 'scoped memory for bottleneck_nhwc.1']
    #allocation5 [shape = 'u8[16384]{0}', space=vmem, size = 0x4000, scoped, tag = 'input window, operand 1']
    #allocation6 [shape = 's32[2]{0}', space=sflag, size = 0x8, scoped, tag = 'scoped memory for bottleneck_nhwc.1']
    #allocation7 [shape = 'u8[16384]{0}', space=vmem, size = 0x4000, scoped, tag = 'input window, operand 2']
    #allocation8 [shape = 'u8[131072]{0}', space=vmem, size = 0x20000, scoped, tag = 'output window, operand 0']
    %14 = vsyncpa [#allocation3], 0
    %s15 = scalar_lea.sflag [#allocation3], 1
    %16 = vsyncpa %s15, 0
    %17 = vsyncpa [#allocation6], 0
    %s18 = scalar_lea.sflag [#allocation6], 1
    %19 = vsyncpa %s18, 0
    %20 = vsyncpa [#allocation4], 0
    %s21 = scalar_lea.sflag [#allocation4], 1
    %22 = vsyncpa %s21, 0
    loop: start=0, step=1, limit=6
    $region2: #{bottleneck_nhwc.1} parent=1 // loop_pre_header
      _
    $region3: #{bottleneck_nhwc.1} parent=1 // loop_header
      %s24 = sphi 0, %s28
      %p25 = scmp.ge.s32.totalorder %s24, 6
      %s31 = sphi 0, %s43
      %s32 = sphi 0, %s39
      %s33 = sphi 0, %s31
      %s34 = sphi 0, %s32
      %s35 = sphi 0, %s33
      %s36 = sphi 0, %s34
      %s48 = sphi 0, %s50
      %s51 = sphi 0, %s48
      %s52 = sphi 0, %s51
      %s68 = sphi 0, %s52
      %s84 = sphi 0, %s86
      %s87 = sphi 0, %s84
      %s88 = sphi 0, %s87
      %s104 = sphi 0, %s88
      %s120 = sphi 0, %s122
      %s123 = sphi 0, %s120
      %s124 = sphi 0, %s123
      %s140 = sphi 0, %s124
      %s144 = sphi 0, %s144
      %s146 = sphi 0, %s144
      %s147 = sphi 0, %s146
      %s161 = sphi 0, %s147
      %s165 = sphi 0, %s165
      %s167 = sphi 0, %s165
      %s168 = sphi 0, %s167
      %s182 = sphi 0, %s168
      %s186 = sphi 0, %s186
      %s188 = sphi 0, %s186
      %s189 = sphi 0, %s188
      %s203 = sphi 0, %s189
      %s207 = sphi 0, %s207
      %s209 = sphi 0, %s207
      %s210 = sphi 0, %s209
      %s224 = sphi 0, %s210
      %s228 = sphi 0, %s228
      %s230 = sphi 0, %s228
      %s231 = sphi 0, %s230
      %s245 = sphi 0, %s231
      %s249 = sphi 0, %s249
      %s251 = sphi 0, %s249
      %s252 = sphi 0, %s251
      %s266 = sphi 0, %s252
      %s274 = sphi 0, %s276
      %s277 = sphi 0, %s274
      %s278 = sphi 0, %s277
      %s294 = sphi 0, %s278
    $region4: #{bottleneck_nhwc.1} parent=1 // loop_header_branch
      %27 = sbr.rel (%p25) target = $region8
    $region5: #{bottleneck_nhwc.1} parent=1 // loop_body
      %s29 = ssub.s32 %s24, 1
      %s30 = ssub.s32 %s24, 2
      %s37 = sadd.s32 1, %s32
      %p38 = scmp.ge.s32.totalorder %s37, 2
      %s39 = scalar_select %p38, 0, %s37
      %s40 = sadd.s32 1, %s31
      %s41 = scalar_select %p38, %s40, %s31
      %p42 = scmp.ge.s32.totalorder %s41, 2
      %s43 = scalar_select %p42, 0, %s41
      %s44 = ssub.s32 %s31, %s43
      %s45 = ssub.s32 %s32, %s39
      %s46 = sor.u32 %s44, %s45
      %p47 = scmp.eq.s32.totalorder %s46, 0
      %s49 = sadd.s32 %s48, 1
      %s50 = scalar_select %p47, %s48, %s49
      %p53 = pneg %p47
      %p54 = scmp.eq.s32.totalorder %s24, 3
      %p55 = por %p53, %p54
      %p56 = scmp.ne.s32.totalorder %s48, %s51
      %p57 = scmp.eq.s32.totalorder %s24, 0
      %p58 = por %p56, %p57
      %p59 = scmp.ne.s32.totalorder %s48, %s51
      %p60 = scmp.eq.s32.totalorder %s29, 3
      %p61 = por %p59, %p60
      %p62 = scmp.ne.s32.totalorder %s51, %s52
      %p63 = scmp.eq.s32.totalorder %s29, 0
      %p64 = por %p62, %p63
      %p65 = scmp.ne.s32.totalorder %s51, %s52
      %p66 = scmp.eq.s32.totalorder %s30, 3
      %p67 = por %p65, %p66
      %p69 = scmp.ne.s32.totalorder %s52, %s68
      %p70 = scmp.eq.s32.totalorder %s30, 0
      %p71 = por %p69, %p70
      %s72 = smul.u32 %s32, 8
      %s73 = ssub.s32 %s72, 1
      %p74 = scmp.gt.s32.totalorder %s73, 0
      %s75 = scalar_select %p74, %s73, 0
      %s76 = smul.u32 %s39, 8
      %s77 = ssub.s32 %s76, 1
      %p78 = scmp.gt.s32.totalorder %s77, 0
      %s79 = scalar_select %p78, %s77, 0
      %s80 = ssub.s32 %s31, %s43
      %s81 = ssub.s32 %s75, %s79
      %s82 = sor.u32 %s80, %s81
      %p83 = scmp.eq.s32.totalorder %s82, 0
      %s85 = sadd.s32 %s84, 1
      %s86 = scalar_select %p83, %s84, %s85
      %p89 = pneg %p83
      %p90 = scmp.eq.s32.totalorder %s24, 3
      %p91 = por %p89, %p90
      %p92 = scmp.ne.s32.totalorder %s84, %s87
      %p93 = scmp.eq.s32.totalorder %s24, 0
      %p94 = por %p92, %p93
      %p95 = scmp.ne.s32.totalorder %s84, %s87
      %p96 = scmp.eq.s32.totalorder %s29, 3
      %p97 = por %p95, %p96
      %p98 = scmp.ne.s32.totalorder %s87, %s88
      %p99 = scmp.eq.s32.totalorder %s29, 0
      %p100 = por %p98, %p99
      %p101 = scmp.ne.s32.totalorder %s87, %s88
      %p102 = scmp.eq.s32.totalorder %s30, 3
      %p103 = por %p101, %p102
      %p105 = scmp.ne.s32.totalorder %s88, %s104
      %p106 = scmp.eq.s32.totalorder %s30, 0
      %p107 = por %p105, %p106
      %s108 = sadd.s32 %s32, 1
      %s109 = smul.u32 %s108, 8
      %p110 = scmp.lt.s32.totalorder %s109, 15
      %s111 = scalar_select %p110, %s109, 15
      %s112 = sadd.s32 %s39, 1
      %s113 = smul.u32 %s112, 8
      %p114 = scmp.lt.s32.totalorder %s113, 15
      %s115 = scalar_select %p114, %s113, 15
      %s116 = ssub.s32 %s31, %s43
      %s117 = ssub.s32 %s111, %s115
      %s118 = sor.u32 %s116, %s117
      %p119 = scmp.eq.s32.totalorder %s118, 0
      %s121 = sadd.s32 %s120, 1
      %s122 = scalar_select %p119, %s120, %s121
      %p125 = pneg %p119
      %p126 = scmp.eq.s32.totalorder %s24, 3
      %p127 = por %p125, %p126
      %p128 = scmp.ne.s32.totalorder %s120, %s123
      %p129 = scmp.eq.s32.totalorder %s24, 0
      %p130 = por %p128, %p129
      %p131 = scmp.ne.s32.totalorder %s120, %s123
      %p132 = scmp.eq.s32.totalorder %s29, 3
      %p133 = por %p131, %p132
      %p134 = scmp.ne.s32.totalorder %s123, %s124
      %p135 = scmp.eq.s32.totalorder %s29, 0
      %p136 = por %p134, %p135
      %p137 = scmp.ne.s32.totalorder %s123, %s124
      %p138 = scmp.eq.s32.totalorder %s30, 3
      %p139 = por %p137, %p138
      %p141 = scmp.ne.s32.totalorder %s124, %s140
      %p142 = scmp.eq.s32.totalorder %s30, 0
      %p143 = por %p141, %p142
      %s145 = sadd.s32 %s144, 1
      %p148 = scmp.eq.s32.totalorder %s24, 3
      %p149 = scmp.ne.s32.totalorder %s144, %s146
      %p150 = scmp.eq.s32.totalorder %s24, 0
      %p151 = por %p149, %p150
      %p152 = scmp.ne.s32.totalorder %s144, %s146
      %p153 = scmp.eq.s32.totalorder %s29, 3
      %p154 = por %p152, %p153
      %p155 = scmp.ne.s32.totalorder %s146, %s147
      %p156 = scmp.eq.s32.totalorder %s29, 0
      %p157 = por %p155, %p156
      %p158 = scmp.ne.s32.totalorder %s146, %s147
      %p159 = scmp.eq.s32.totalorder %s30, 3
      %p160 = por %p158, %p159
      %p162 = scmp.ne.s32.totalorder %s147, %s161
      %p163 = scmp.eq.s32.totalorder %s30, 0
      %p164 = por %p162, %p163
      %s166 = sadd.s32 %s165, 1
      %p169 = scmp.eq.s32.totalorder %s24, 3
      %p170 = scmp.ne.s32.totalorder %s165, %s167
      %p171 = scmp.eq.s32.totalorder %s24, 0
      %p172 = por %p170, %p171
      %p173 = scmp.ne.s32.totalorder %s165, %s167
      %p174 = scmp.eq.s32.totalorder %s29, 3
      %p175 = por %p173, %p174
      %p176 = scmp.ne.s32.totalorder %s167, %s168
      %p177 = scmp.eq.s32.totalorder %s29, 0
      %p178 = por %p176, %p177
      %p179 = scmp.ne.s32.totalorder %s167, %s168
      %p180 = scmp.eq.s32.totalorder %s30, 3
      %p181 = por %p179, %p180
      %p183 = scmp.ne.s32.totalorder %s168, %s182
      %p184 = scmp.eq.s32.totalorder %s30, 0
      %p185 = por %p183, %p184
      %s187 = sadd.s32 %s186, 1
      %p190 = scmp.eq.s32.totalorder %s24, 3
      %p191 = scmp.ne.s32.totalorder %s186, %s188
      %p192 = scmp.eq.s32.totalorder %s24, 0
      %p193 = por %p191, %p192
      %p194 = scmp.ne.s32.totalorder %s186, %s188
      %p195 = scmp.eq.s32.totalorder %s29, 3
      %p196 = por %p194, %p195
      %p197 = scmp.ne.s32.totalorder %s188, %s189
      %p198 = scmp.eq.s32.totalorder %s29, 0
      %p199 = por %p197, %p198
      %p200 = scmp.ne.s32.totalorder %s188, %s189
      %p201 = scmp.eq.s32.totalorder %s30, 3
      %p202 = por %p200, %p201
      %p204 = scmp.ne.s32.totalorder %s189, %s203
      %p205 = scmp.eq.s32.totalorder %s30, 0
      %p206 = por %p204, %p205
      %s208 = sadd.s32 %s207, 1
      %p211 = scmp.eq.s32.totalorder %s24, 3
      %p212 = scmp.ne.s32.totalorder %s207, %s209
      %p213 = scmp.eq.s32.totalorder %s24, 0
      %p214 = por %p212, %p213
      %p215 = scmp.ne.s32.totalorder %s207, %s209
      %p216 = scmp.eq.s32.totalorder %s29, 3
      %p217 = por %p215, %p216
      %p218 = scmp.ne.s32.totalorder %s209, %s210
      %p219 = scmp.eq.s32.totalorder %s29, 0
      %p220 = por %p218, %p219
      %p221 = scmp.ne.s32.totalorder %s209, %s210
      %p222 = scmp.eq.s32.totalorder %s30, 3
      %p223 = por %p221, %p222
      %p225 = scmp.ne.s32.totalorder %s210, %s224
      %p226 = scmp.eq.s32.totalorder %s30, 0
      %p227 = por %p225, %p226
      %s229 = sadd.s32 %s228, 1
      %p232 = scmp.eq.s32.totalorder %s24, 3
      %p233 = scmp.ne.s32.totalorder %s228, %s230
      %p234 = scmp.eq.s32.totalorder %s24, 0
      %p235 = por %p233, %p234
      %p236 = scmp.ne.s32.totalorder %s228, %s230
      %p237 = scmp.eq.s32.totalorder %s29, 3
      %p238 = por %p236, %p237
      %p239 = scmp.ne.s32.totalorder %s230, %s231
      %p240 = scmp.eq.s32.totalorder %s29, 0
      %p241 = por %p239, %p240
      %p242 = scmp.ne.s32.totalorder %s230, %s231
      %p243 = scmp.eq.s32.totalorder %s30, 3
      %p244 = por %p242, %p243
      %p246 = scmp.ne.s32.totalorder %s231, %s245
      %p247 = scmp.eq.s32.totalorder %s30, 0
      %p248 = por %p246, %p247
      %s250 = sadd.s32 %s249, 1
      %p253 = scmp.eq.s32.totalorder %s24, 3
      %p254 = scmp.ne.s32.totalorder %s249, %s251
      %p255 = scmp.eq.s32.totalorder %s24, 0
      %p256 = por %p254, %p255
      %p257 = scmp.ne.s32.totalorder %s249, %s251
      %p258 = scmp.eq.s32.totalorder %s29, 3
      %p259 = por %p257, %p258
      %p260 = scmp.ne.s32.totalorder %s251, %s252
      %p261 = scmp.eq.s32.totalorder %s29, 0
      %p262 = por %p260, %p261
      %p263 = scmp.ne.s32.totalorder %s251, %s252
      %p264 = scmp.eq.s32.totalorder %s30, 3
      %p265 = por %p263, %p264
      %p267 = scmp.ne.s32.totalorder %s252, %s266
      %p268 = scmp.eq.s32.totalorder %s30, 0
      %p269 = por %p267, %p268
      %s270 = ssub.s32 %s31, %s43
      %s271 = ssub.s32 %s32, %s39
      %s272 = sor.u32 %s270, %s271
      %p273 = scmp.eq.s32.totalorder %s272, 0
      %s275 = sadd.s32 %s274, 1
      %s276 = scalar_select %p273, %s274, %s275
      %p279 = pneg %p273
      %p280 = scmp.eq.s32.totalorder %s24, 3
      %p281 = por %p279, %p280
      %p282 = scmp.ne.s32.totalorder %s274, %s277
      %p283 = scmp.eq.s32.totalorder %s24, 0
      %p284 = por %p282, %p283
      %p285 = scmp.ne.s32.totalorder %s274, %s277
      %p286 = scmp.eq.s32.totalorder %s29, 3
      %p287 = por %p285, %p286
      %p288 = scmp.ne.s32.totalorder %s277, %s278
      %p289 = scmp.eq.s32.totalorder %s29, 0
      %p290 = por %p288, %p289
      %p291 = scmp.ne.s32.totalorder %s277, %s278
      %p292 = scmp.eq.s32.totalorder %s30, 3
      %p293 = por %p291, %p292
      %p295 = scmp.ne.s32.totalorder %s278, %s294
      %p296 = scmp.eq.s32.totalorder %s30, 0
      %p297 = por %p295, %p296
      %p298 = scmp.le.s32.totalorder 1, %s24
      %p299 = scmp.lt.s32.totalorder %s24, 5
      %p300 = pnand %p298, %p299
      %p301 = pneg %p300
      // Predicated region
      $region9: #{bottleneck_nhwc.1} parent=5 // pred_check
        _
      $region10: #{bottleneck_nhwc.1} parent=5 // pred_check_branch
        %303 = sbr.rel (%p300) target = $region12
      $region11: #{bottleneck_nhwc.1} parent=5 // pred_region
        %s304 = ssub.s32 %s24, 1
        // Predicated region
        $region13: #{bottleneck_nhwc.1} parent=11 // pred_check
          %p305 = pneg %p157
        $region14: #{bottleneck_nhwc.1} parent=11 // pred_check_branch
          %307 = sbr.rel (%p305) target = $region16
        $region15: #{bottleneck_nhwc.1} parent=11 // pred_region
          _
        $region16: #{bottleneck_nhwc.1} parent=11 // pred_fallthru
          _
        // Predicated region
        $region17: #{bottleneck_nhwc.1} parent=11 // pred_check
          %p308 = pneg %p178
        $region18: #{bottleneck_nhwc.1} parent=11 // pred_check_branch
          %310 = sbr.rel (%p308) target = $region20
        $region19: #{bottleneck_nhwc.1} parent=11 // pred_region
          _
        $region20: #{bottleneck_nhwc.1} parent=11 // pred_fallthru
          _
        // Predicated region
        $region21: #{bottleneck_nhwc.1} parent=11 // pred_check
          %p311 = pneg %p199
        $region22: #{bottleneck_nhwc.1} parent=11 // pred_check_branch
          %313 = sbr.rel (%p311) target = $region24
        $region23: #{bottleneck_nhwc.1} parent=11 // pred_region
          _
        $region24: #{bottleneck_nhwc.1} parent=11 // pred_fallthru
          _
        // Predicated region
        $region25: #{bottleneck_nhwc.1} parent=11 // pred_check
          %p314 = pneg %p220
        $region26: #{bottleneck_nhwc.1} parent=11 // pred_check_branch
          %316 = sbr.rel (%p314) target = $region28
        $region27: #{bottleneck_nhwc.1} parent=11 // pred_region
          _
        $region28: #{bottleneck_nhwc.1} parent=11 // pred_fallthru
          _
        // Predicated region
        $region29: #{bottleneck_nhwc.1} parent=11 // pred_check
          %p317 = pneg %p241
        $region30: #{bottleneck_nhwc.1} parent=11 // pred_check_branch
          %319 = sbr.rel (%p317) target = $region32
        $region31: #{bottleneck_nhwc.1} parent=11 // pred_region
          _
        $region32: #{bottleneck_nhwc.1} parent=11 // pred_fallthru
          _
        // Predicated region
        $region33: #{bottleneck_nhwc.1} parent=11 // pred_check
          %p320 = pneg %p262
        $region34: #{bottleneck_nhwc.1} parent=11 // pred_check_branch
          %322 = sbr.rel (%p320) target = $region36
        $region35: #{bottleneck_nhwc.1} parent=11 // pred_region
          _
        $region36: #{bottleneck_nhwc.1} parent=11 // pred_fallthru
          _
      $region12: #{bottleneck_nhwc.1} parent=5 // pred_fallthru
        _
      %p323 = scmp.lt.s32.totalorder %s24, 4
      // Predicated region
      $region37: #{bottleneck_nhwc.1} parent=5 // pred_check
        %p324 = pneg %p323
      $region38: #{bottleneck_nhwc.1} parent=5 // pred_check_branch
        %326 = sbr.rel (%p324) target = $region40
      $region39: #{bottleneck_nhwc.1} parent=5 // pred_region
        // Predicated region
        $region41: #{bottleneck_nhwc.1} parent=39 // pred_check
          %p327 = pneg %p58
        $region42: #{bottleneck_nhwc.1} parent=39 // pred_check_branch
          %329 = sbr.rel (%p327) target = $region44
        $region43: #{bottleneck_nhwc.1} parent=39 // pred_region
          %s330 = sand.u32 %s48, 1
          %s331 = scalar_lea.sflag [#allocation3], %s330
          %s332 = sand.u32 %s48, 1
          %s333 = smul.addr %s332, 128
          %s334 = scalar_lea.vmem [#allocation2], %s333
          %s335 = smul.u32 8, %s32
          %s337 = ssub.s32 2048, 2048
          %338 = vsyncadd %s331, %s337
          %s339 = smul.addr %s335, 2
          %s340 = smul.addr %s31, 32
          %s341 = sadd.s32 %s339, %s340
          %s342 = smul.addr %s341, 128
          %s343 = scalar_lea.hbm %s0, %s342
          %s344 = sshll.u32 %s334, 4
          %s345 = int_to_ptr.vmem [resolvable:$true] %s344
          %350 = dma.hbm_to_vmem [thread:$0]  %s343, 2048, %s345, %s331, 128, 128, 8
        $region44: #{bottleneck_nhwc.1} parent=39 // pred_fallthru
          _
        // Predicated region
        $region45: #{bottleneck_nhwc.1} parent=39 // pred_check
          %p351 = pneg %p94
        $region46: #{bottleneck_nhwc.1} parent=39 // pred_check_branch
          %353 = sbr.rel (%p351) target = $region48
        $region47: #{bottleneck_nhwc.1} parent=39 // pred_region
          %s354 = sand.u32 %s24, 1
          %s355 = scalar_lea.sflag [#allocation6], %s354
          %s356 = sand.u32 %s84, 1
          %s357 = smul.addr %s356, 16
          %s358 = scalar_lea.vmem [#allocation5], %s357
          %s359 = smul.u32 %s32, 8
          %s360 = ssub.s32 %s359, 1
          %p361 = scmp.gt.s32.totalorder %s360, 0
          %s362 = scalar_select %p361, %s360, 0
          %s364 = ssub.s32 256, 256
          %365 = vsyncadd %s355, %s364
          %s366 = smul.addr %s362, 2
          %s367 = smul.addr %s31, 32
          %s368 = sadd.s32 %s366, %s367
          %s369 = smul.addr %s368, 128
          %s370 = scalar_lea.hbm %s1, %s369
          %s371 = sshll.u32 %s358, 4
          %s372 = int_to_ptr.vmem [resolvable:$true] %s371
          %377 = dma.hbm_to_vmem [thread:$0]  %s370, 256, %s372, %s355, 128, 128, 8
        $region48: #{bottleneck_nhwc.1} parent=39 // pred_fallthru
          _
        // Predicated region
        $region49: #{bottleneck_nhwc.1} parent=39 // pred_check
          %p378 = pneg %p130
        $region50: #{bottleneck_nhwc.1} parent=39 // pred_check_branch
          %380 = sbr.rel (%p378) target = $region52
        $region51: #{bottleneck_nhwc.1} parent=39 // pred_region
          %s381 = sand.u32 %s24, 1
          %s382 = scalar_lea.sflag [#allocation6], %s381
          %s383 = sand.u32 %s120, 1
          %s384 = smul.addr %s383, 16
          %s385 = scalar_lea.vmem [#allocation7], %s384
          %s386 = sadd.s32 %s32, 1
          %s387 = smul.u32 %s386, 8
          %p388 = scmp.lt.s32.totalorder %s387, 15
          %s389 = scalar_select %p388, %s387, 15
          %s391 = ssub.s32 256, 256
          %392 = vsyncadd %s382, %s391
          %s393 = smul.addr %s389, 2
          %s394 = smul.addr %s31, 32
          %s395 = sadd.s32 %s393, %s394
          %s396 = smul.addr %s395, 128
          %s397 = scalar_lea.hbm %s2, %s396
          %s398 = sshll.u32 %s385, 4
          %s399 = int_to_ptr.vmem [resolvable:$true] %s398
          %404 = dma.hbm_to_vmem [thread:$0]  %s397, 256, %s399, %s382, 128, 128, 8
        $region52: #{bottleneck_nhwc.1} parent=39 // pred_fallthru
          _
      $region40: #{bottleneck_nhwc.1} parent=5 // pred_fallthru
        _
      %p405 = scmp.le.s32.totalorder 1, %s24
      %p406 = scmp.lt.s32.totalorder %s24, 5
      %p407 = pnand %p405, %p406
      %p408 = pneg %p407
      // Predicated region
      $region53: #{bottleneck_nhwc.1} parent=5 // pred_check
        _
      $region54: #{bottleneck_nhwc.1} parent=5 // pred_check_branch
        %410 = sbr.rel (%p407) target = $region56
      $region55: #{bottleneck_nhwc.1} parent=5 // pred_region
        %s411 = ssub.s32 %s24, 1
        %s412 = sand.u32 %s51, 1
        %s413 = scalar_lea.sflag [#allocation3], %s412
        %s414 = sand.u32 %s51, 1
        %s415 = smul.addr %s414, 128
        %s416 = scalar_lea.vmem [#allocation2], %s415
        // Predicated region
        $region57: #{bottleneck_nhwc.1} parent=55 // pred_check
          %p417 = pneg %p64
        $region58: #{bottleneck_nhwc.1} parent=55 // pred_check_branch
          %419 = sbr.rel (%p417) target = $region60
        $region59: #{bottleneck_nhwc.1} parent=55 // pred_region
          %420 = dma.done %s413, 2048
        $region60: #{bottleneck_nhwc.1} parent=55 // pred_fallthru
          _
        %s421 = sand.u32 %s29, 1
        %s422 = scalar_lea.sflag [#allocation6], %s421
        %s423 = sand.u32 %s87, 1
        %s424 = smul.addr %s423, 16
        %s425 = scalar_lea.vmem [#allocation5], %s424
        // Predicated region
        $region61: #{bottleneck_nhwc.1} parent=55 // pred_check
          %p426 = pneg %p100
        $region62: #{bottleneck_nhwc.1} parent=55 // pred_check_branch
          %428 = sbr.rel (%p426) target = $region64
        $region63: #{bottleneck_nhwc.1} parent=55 // pred_region
          %429 = dma.done %s422, 256
        $region64: #{bottleneck_nhwc.1} parent=55 // pred_fallthru
          _
        %s430 = sand.u32 %s29, 1
        %s431 = scalar_lea.sflag [#allocation6], %s430
        %s432 = sand.u32 %s123, 1
        %s433 = smul.addr %s432, 16
        %s434 = scalar_lea.vmem [#allocation7], %s433
        // Predicated region
        $region65: #{bottleneck_nhwc.1} parent=55 // pred_check
          %p435 = pneg %p136
        $region66: #{bottleneck_nhwc.1} parent=55 // pred_check_branch
          %437 = sbr.rel (%p435) target = $region68
        $region67: #{bottleneck_nhwc.1} parent=55 // pred_region
          %438 = dma.done %s431, 256
        $region68: #{bottleneck_nhwc.1} parent=55 // pred_fallthru
          _
        %s439 = sand.u32 %s51, 1
        %s440 = scalar_lea.sflag [#allocation3], %s439
        %s441 = sand.u32 %s51, 1
        %s442 = smul.addr %s441, 128
        %s443 = scalar_lea.vmem [#allocation2], %s442
        %p444 = pneg %p64
        %p445 = pneg %p61
        %s446 = sand.u32 %s29, 1
        %s447 = scalar_lea.sflag [#allocation6], %s446
        %s448 = sand.u32 %s87, 1
        %s449 = smul.addr %s448, 16
        %s450 = scalar_lea.vmem [#allocation5], %s449
        %p451 = pneg %p100
        %p452 = pneg %p97
        %s453 = sand.u32 %s29, 1
        %s454 = scalar_lea.sflag [#allocation6], %s453
        %s455 = sand.u32 %s123, 1
        %s456 = smul.addr %s455, 16
        %s457 = scalar_lea.vmem [#allocation7], %s456
        %p458 = pneg %p136
        %p459 = pneg %p133
        %p460 = pneg %p157
        %p461 = pneg %p154
        %p462 = pneg %p178
        %p463 = pneg %p175
        %p464 = pneg %p199
        %p465 = pneg %p196
        %p466 = pneg %p220
        %p467 = pneg %p217
        %p468 = pneg %p241
        %p469 = pneg %p238
        %p470 = pneg %p262
        %p471 = pneg %p259
        %p472 = pneg %p290
        %p473 = pneg %p287
        %s474 = sand.u32 %s277, 1
        %s475 = scalar_lea.sflag [#allocation4], %s474
        %s476 = sand.u32 %s277, 1
        %s477 = smul.addr %s476, 128
        %s478 = scalar_lea.vmem [#allocation8], %s477
        %s479 = smul.u32 8, %s34
        %s480 = smul.u32 %s34, 8
        %s481 = ssub.s32 %s480, 1
        %p482 = scmp.gt.s32.totalorder %s481, 0
        %s483 = scalar_select %p482, %s481, 0
        %s484 = sadd.s32 %s34, 1
        %s485 = smul.u32 %s484, 8
        %p486 = scmp.lt.s32.totalorder %s485, 15
        %s487 = scalar_select %p486, %s485, 15
        %s488 = smul.u32 8, %s34
        %p490 = scmp.eq.s32.totalorder %s34, 0
        %p491 = scmp.eq.s32.totalorder %s34, 1
        %v492 = vld [vmem:[%s425] sm:$0xff]
        %v493 = vld [vmem:[%s425 + $0x8] sm:$0xff]
        %v494 = vld [vmem:[%s416] sm:$0xff]
        %v495 = vld [vmem:[%s416 + $0x8] sm:$0xff]
        %v496 = vld [vmem:[%s416 + $0x10] sm:$0xff]
        %v497 = vld [vmem:[%s416 + $0x18] sm:$0xff]
        %v498 = vld [vmem:[%s416 + $0x20] sm:$0xff]
        %v499 = vld [vmem:[%s416 + $0x28] sm:$0xff]
        %v500 = vld [vmem:[%s416 + $0x30] sm:$0xff]
        %v501 = vld [vmem:[%s416 + $0x38] sm:$0xff]
        %v502 = vld [vmem:[%s416 + $0x40] sm:$0xff]
        %v503 = vld [vmem:[%s416 + $0x48] sm:$0xff]
        %v504 = vld [vmem:[%s416 + $0x50] sm:$0xff]
        %v505 = vld [vmem:[%s416 + $0x58] sm:$0xff]
        %v506 = vld [vmem:[%s416 + $0x60] sm:$0xff]
        %v507 = vld [vmem:[%s416 + $0x68] sm:$0xff]
        %v508 = vld [vmem:[%s416 + $0x70] sm:$0xff]
        %v509 = vld [vmem:[%s416 + $0x78] sm:$0xff]
        %v510 = vld [vmem:[%s434] sm:$0xff]
        %v511 = vld [vmem:[%s434 + $0x8] sm:$0xff]
        %v512 = vpack.c.bf16 %v493, %v492
        %v513 = vpack.c.bf16 %v495, %v494
        %v514 = vpack.c.bf16 %v497, %v496
        %v515 = vpack.c.bf16 %v499, %v498
        %v516 = vpack.c.bf16 %v501, %v500
        %v517 = vpack.c.bf16 %v503, %v502
        %v518 = vpack.c.bf16 %v505, %v504
        %v519 = vpack.c.bf16 %v507, %v506
        %v520 = vpack.c.bf16 %v509, %v508
        %v521 = vpack.c.bf16 %v511, %v510
        %v522 = vld [vmem:[%s3] sm:$0xf]
        %v523 = vld [vmem:[%s3 + $0x4] sm:$0xf]
        %v524 = vld [vmem:[%s4] sm:$0x1]
        %v526 = vlaneseq
        %v527 = vshrl.u32 %v526, 7
        %v528 = vsub.s32 0, %v527
        %v529 = vrot.slane %v524, %v528
        %v533 = vunpack.c.l.b16 %v522
        %v534 = vunpack.c.l.b16 %v523
        %v535 = vpack.c.b16 %v534, %v533
        %vm537 = vcmask 130048
        %v539 = vsel %vm537, %v512, 0
        %v542 = vsel %vm537, %v513, 0
        %v545 = vsel %vm537, %v514, 0
        %v548 = vsel %vm537, %v515, 0
        %v551 = vsel %vm537, %v516, 0
        %v554 = vsel %vm537, %v517, 0
        %v557 = vsel %vm537, %v518, 0
        %v560 = vsel %vm537, %v519, 0
        %v563 = vsel %vm537, %v520, 0
        %v566 = vsel %vm537, %v521, 0
        %568 = vmatprep.subr.bf16.mxu0 0
        %569 = vmatpush1.bf16.msra.mxu0 %v535
        %570 = vmatprep.subr.bf16.mxu0 0
        %571 = vmatpush1.bf16.msra.mxu0 0
        %572 = vmatprep.subr.bf16.mxu0 0
        %573 = vmatpush1.bf16.msra.mxu0 0
        %574 = vmatprep.subr.bf16.mxu0 0
        %575 = vmatpush1.bf16.msra.mxu0 0
        %576 = vmatprep.subr.bf16.mxu0 0
        %577 = vmatpush1.bf16.msra.mxu0 0
        %578 = vmatprep.subr.bf16.mxu0 0
        %579 = vmatpush1.bf16.msra.mxu0 0
        %580 = vmatprep.subr.bf16.mxu0 0
        %581 = vmatpush1.bf16.msra.mxu0 0
        %582 = vmatprep.subr.bf16.mxu0 0
        %583 = vmatpush1.bf16.msra.mxu0 0
        %584 = vmatprep.subr.bf16.mxu0 0
        %585 = vmatpush1.bf16.msra.mxu0 0
        %586 = vmatprep.subr.bf16.mxu0 0
        %587 = vmatpush1.bf16.msra.mxu0 0
        %588 = vmatprep.subr.bf16.mxu0 0
        %589 = vmatpush1.bf16.msra.mxu0 0
        %590 = vmatprep.subr.bf16.mxu0 0
        %591 = vmatpush1.bf16.msra.mxu0 0
        %592 = vmatprep.subr.bf16.mxu0 0
        %593 = vmatpush1.bf16.msra.mxu0 0
        %594 = vmatprep.subr.bf16.mxu0 0
        %595 = vmatpush1.bf16.msra.mxu0 0
        %596 = vmatprep.subr.bf16.mxu0 0
        %597 = vmatpush1.bf16.msra.mxu0 0
        %598 = vmatprep.subr.bf16.mxu0 0
        %599 = vmatpush1.bf16.msra.mxu0 0
        %600 = vmatprep.mubr.bf16.mxu0 0
        %601 = vmatmul.mubr.bf16.gmra.mrb[0].mxu0 %v539
        %v602 = vpop.f32.mrb[0].mxu0
        %v603 = vadd.f32 %v529, %v602
        %v604 = vpop.f32.mrb[0].mxu0
        %v605 = vpop.f32.mrb[0].mxu0
        %v606 = vadd.f32 %v529, %v605
        %v607 = vpop.f32.mrb[0].mxu0
        %608 = vmatprep.mubr.bf16.mxu0 0
        %609 = vmatmul.mubr.bf16.gmra.mrb[0].mxu0 %v542
        %v610 = vpop.f32.mrb[0].mxu0
        %v611 = vadd.f32 %v529, %v610
        %v612 = vpop.f32.mrb[0].mxu0
        %v613 = vpop.f32.mrb[0].mxu0
        %v614 = vadd.f32 %v529, %v613
        %v615 = vpop.f32.mrb[0].mxu0
        %616 = vmatprep.mubr.bf16.mxu0 0
        %617 = vmatmul.mubr.bf16.gmra.mrb[0].mxu0 %v545
        %v618 = vpop.f32.mrb[0].mxu0
        %v619 = vadd.f32 %v529, %v618
        %v620 = vpop.f32.mrb[0].mxu0
        %v621 = vpop.f32.mrb[0].mxu0
        %v622 = vadd.f32 %v529, %v621
        %v623 = vpop.f32.mrb[0].mxu0
        %624 = vmatprep.mubr.bf16.mxu0 0
        %625 = vmatmul.mubr.bf16.gmra.mrb[0].mxu0 %v548
        %v626 = vpop.f32.mrb[0].mxu0
        %v627 = vadd.f32 %v529, %v626
        %v628 = vpop.f32.mrb[0].mxu0
        %v629 = vpop.f32.mrb[0].mxu0
        %v630 = vadd.f32 %v529, %v629
        %v631 = vpop.f32.mrb[0].mxu0
        %632 = vmatprep.mubr.bf16.mxu0 0
        %633 = vmatmul.mubr.bf16.gmra.mrb[0].mxu0 %v551
        %v634 = vpop.f32.mrb[0].mxu0
        %v635 = vadd.f32 %v529, %v634
        %v636 = vpop.f32.mrb[0].mxu0
        %v637 = vpop.f32.mrb[0].mxu0
        %v638 = vadd.f32 %v529, %v637
        %v639 = vpop.f32.mrb[0].mxu0
        %640 = vmatprep.mubr.bf16.mxu0 0
        %641 = vmatmul.mubr.bf16.gmra.mrb[0].mxu0 %v554
        %v642 = vpop.f32.mrb[0].mxu0
        %v643 = vadd.f32 %v529, %v642
        %v644 = vpop.f32.mrb[0].mxu0
        %v645 = vpop.f32.mrb[0].mxu0
        %v646 = vadd.f32 %v529, %v645
        %v647 = vpop.f32.mrb[0].mxu0
        %648 = vmatprep.mubr.bf16.mxu0 0
        %649 = vmatmul.mubr.bf16.gmra.mrb[0].mxu0 %v557
        %v650 = vpop.f32.mrb[0].mxu0
        %v651 = vadd.f32 %v529, %v650
        %v652 = vpop.f32.mrb[0].mxu0
        %v653 = vpop.f32.mrb[0].mxu0
        %v654 = vadd.f32 %v529, %v653
        %v655 = vpop.f32.mrb[0].mxu0
        %656 = vmatprep.mubr.bf16.mxu0 0
        %657 = vmatmul.mubr.bf16.gmra.mrb[0].mxu0 %v560
        %v658 = vpop.f32.mrb[0].mxu0
        %v659 = vadd.f32 %v529, %v658
        %v660 = vpop.f32.mrb[0].mxu0
        %v661 = vpop.f32.mrb[0].mxu0
        %v662 = vadd.f32 %v529, %v661
        %v663 = vpop.f32.mrb[0].mxu0
        %664 = vmatprep.mubr.bf16.mxu0 0
        %665 = vmatmul.mubr.bf16.gmra.mrb[0].mxu0 %v563
        %v666 = vpop.f32.mrb[0].mxu0
        %v667 = vadd.f32 %v529, %v666
        %v668 = vpop.f32.mrb[0].mxu0
        %v669 = vpop.f32.mrb[0].mxu0
        %v670 = vadd.f32 %v529, %v669
        %v671 = vpop.f32.mrb[0].mxu0
        %672 = vmatprep.mubr.bf16.mxu0 0
        %673 = vmatmul.mubr.bf16.gmra.mrb[0].mxu0 %v566
        %v674 = vpop.f32.mrb[0].mxu0
        %v675 = vadd.f32 %v529, %v674
        %v676 = vpop.f32.mrb[0].mxu0
        %v677 = vpop.f32.mrb[0].mxu0
        %v678 = vadd.f32 %v529, %v677
        %v679 = vpop.f32.mrb[0].mxu0
        %680 = vdwg.mxu0
        %v681 = vmax.f32 %v603, 0.0
        %v682 = vmax.f32 %v606, 0.0
        %v683 = vmax.f32 %v611, 0.0
        %v684 = vmax.f32 %v614, 0.0
        %v685 = vmax.f32 %v619, 0.0
        %v686 = vmax.f32 %v622, 0.0
        %v687 = vmax.f32 %v627, 0.0
        %v688 = vmax.f32 %v630, 0.0
        %v689 = vmax.f32 %v635, 0.0
        %v690 = vmax.f32 %v638, 0.0
        %v691 = vmax.f32 %v643, 0.0
        %v692 = vmax.f32 %v646, 0.0
        %v693 = vmax.f32 %v651, 0.0
        %v694 = vmax.f32 %v654, 0.0
        %v695 = vmax.f32 %v659, 0.0
        %v696 = vmax.f32 %v662, 0.0
        %v697 = vmax.f32 %v667, 0.0
        %v698 = vmax.f32 %v670, 0.0
        %v699 = vmax.f32 %v675, 0.0
        %v700 = vmax.f32 %v678, 0.0
        %v701 = vlaneseq
        %v702 = vshrl.u32 %v701, 7
        %v703 = vadd.s32 %v702, 8
        %v704 = vadd.s32 %v702, 16
        %v705 = vadd.s32 %v702, 24
        %v706 = vadd.s32 %v702, 32
        %v707 = vadd.s32 %v702, 40
        %v708 = vadd.s32 %v702, 48
        %v709 = vadd.s32 %v702, 56
        %v710 = vadd.s32 %v702, 64
        %v711 = vadd.s32 %v702, 72
        %v712 = vadd.s32 %v702, 80
        %v713 = vadd.s32 %v702, 88
        %v714 = vadd.s32 %v702, 96
        %v715 = vadd.s32 %v702, 104
        %v716 = vadd.s32 %v702, 112
        %v717 = vadd.s32 %v702, 120
        %v718 = vadd.s32 %v702, 128
        %v719 = vadd.s32 %v702, 136
        %v720 = vadd.s32 %v702, 144
        %v721 = vadd.s32 %v702, 152
        %vm722 = vcmp.lt.s32.totalorder %v702, 16
        %vm723 = vcmp.lt.s32.totalorder %v703, 16
        %vm724 = vcmp.lt.s32.totalorder %v704, 16
        %vm725 = vcmp.lt.s32.totalorder %v705, 16
        %vm726 = vcmp.lt.s32.totalorder %v706, 16
        %vm727 = vcmp.lt.s32.totalorder %v707, 16
        %vm728 = vcmp.lt.s32.totalorder %v708, 16
        %vm729 = vcmp.lt.s32.totalorder %v709, 16
        %vm730 = vcmp.lt.s32.totalorder %v710, 16
        %vm731 = vcmp.lt.s32.totalorder %v711, 16
        %vm732 = vcmp.lt.s32.totalorder %v712, 16
        %vm733 = vcmp.lt.s32.totalorder %v713, 16
        %vm734 = vcmp.lt.s32.totalorder %v714, 16
        %vm735 = vcmp.lt.s32.totalorder %v715, 16
        %vm736 = vcmp.lt.s32.totalorder %v716, 16
        %vm737 = vcmp.lt.s32.totalorder %v717, 16
        %vm738 = vcmp.lt.s32.totalorder %v718, 16
        %vm739 = vcmp.lt.s32.totalorder %v719, 16
        %vm740 = vcmp.lt.s32.totalorder %v720, 16
        %vm741 = vcmp.lt.s32.totalorder %v721, 16
        %s742 = scalar_select %p490, 1, 0
        %v743 = vstv %s742
        %vm744 = vcmp.eq.s32.totalorder %v743, 1
        %vm745 = vmand %vm744, %vm722
        %vm746 = vmand %vm744, %vm723
        %vm747 = vmand %vm744, %vm724
        %vm748 = vmand %vm744, %vm725
        %vm749 = vmand %vm744, %vm726
        %vm750 = vmand %vm744, %vm727
        %vm751 = vmand %vm744, %vm728
        %vm752 = vmand %vm744, %vm729
        %vm753 = vmand %vm744, %vm730
        %vm754 = vmand %vm744, %vm731
        %vm755 = vmand %vm744, %vm732
        %vm756 = vmand %vm744, %vm733
        %vm757 = vmand %vm744, %vm734
        %vm758 = vmand %vm744, %vm735
        %vm759 = vmand %vm744, %vm736
        %vm760 = vmand %vm744, %vm737
        %vm761 = vmand %vm744, %vm738
        %vm762 = vmand %vm744, %vm739
        %vm763 = vmand %vm744, %vm740
        %vm764 = vmand %vm744, %vm741
        %vm765 = vcmp.ge.s32.totalorder %v702, 144
        %vm766 = vcmp.ge.s32.totalorder %v703, 144
        %vm767 = vcmp.ge.s32.totalorder %v704, 144
        %vm768 = vcmp.ge.s32.totalorder %v705, 144
        %vm769 = vcmp.ge.s32.totalorder %v706, 144
        %vm770 = vcmp.ge.s32.totalorder %v707, 144
        %vm771 = vcmp.ge.s32.totalorder %v708, 144
        %vm772 = vcmp.ge.s32.totalorder %v709, 144
        %vm773 = vcmp.ge.s32.totalorder %v710, 144
        %vm774 = vcmp.ge.s32.totalorder %v711, 144
        %vm775 = vcmp.ge.s32.totalorder %v712, 144
        %vm776 = vcmp.ge.s32.totalorder %v713, 144
        %vm777 = vcmp.ge.s32.totalorder %v714, 144
        %vm778 = vcmp.ge.s32.totalorder %v715, 144
        %vm779 = vcmp.ge.s32.totalorder %v716, 144
        %vm780 = vcmp.ge.s32.totalorder %v717, 144
        %vm781 = vcmp.ge.s32.totalorder %v718, 144
        %vm782 = vcmp.ge.s32.totalorder %v719, 144
        %vm783 = vcmp.ge.s32.totalorder %v720, 144
        %vm784 = vcmp.ge.s32.totalorder %v721, 144
        %s785 = scalar_select %p491, 1, 0
        %v786 = vstv %s785
        %vm787 = vcmp.eq.s32.totalorder %v786, 1
        %vm788 = vmand %vm787, %vm765
        %vm789 = vmand %vm787, %vm766
        %vm790 = vmand %vm787, %vm767
        %vm791 = vmand %vm787, %vm768
        %vm792 = vmand %vm787, %vm769
        %vm793 = vmand %vm787, %vm770
        %vm794 = vmand %vm787, %vm771
        %vm795 = vmand %vm787, %vm772
        %vm796 = vmand %vm787, %vm773
        %vm797 = vmand %vm787, %vm774
        %vm798 = vmand %vm787, %vm775
        %vm799 = vmand %vm787, %vm776
        %vm800 = vmand %vm787, %vm777
        %vm801 = vmand %vm787, %vm778
        %vm802 = vmand %vm787, %vm779
        %vm803 = vmand %vm787, %vm780
        %vm804 = vmand %vm787, %vm781
        %vm805 = vmand %vm787, %vm782
        %vm806 = vmand %vm787, %vm783
        %vm807 = vmand %vm787, %vm784
        %vm808 = vmor %vm745, %vm788
        %vm809 = vmor %vm746, %vm789
        %vm810 = vmor %vm747, %vm790
        %vm811 = vmor %vm748, %vm791
        %vm812 = vmor %vm749, %vm792
        %vm813 = vmor %vm750, %vm793
        %vm814 = vmor %vm751, %vm794
        %vm815 = vmor %vm752, %vm795
        %vm816 = vmor %vm753, %vm796
        %vm817 = vmor %vm754, %vm797
        %vm818 = vmor %vm755, %vm798
        %vm819 = vmor %vm756, %vm799
        %vm820 = vmor %vm757, %vm800
        %vm821 = vmor %vm758, %vm801
        %vm822 = vmor %vm759, %vm802
        %vm823 = vmor %vm760, %vm803
        %vm824 = vmor %vm761, %vm804
        %vm825 = vmor %vm762, %vm805
        %vm826 = vmor %vm763, %vm806
        %vm827 = vmor %vm764, %vm807
        %v828 = vsel %vm808, 1, 0
        %v829 = vsel %vm809, 1, 0
        %v830 = vsel %vm810, 1, 0
        %v831 = vsel %vm811, 1, 0
        %v832 = vsel %vm812, 1, 0
        %v833 = vsel %vm813, 1, 0
        %v834 = vsel %vm814, 1, 0
        %v835 = vsel %vm815, 1, 0
        %v836 = vsel %vm816, 1, 0
        %v837 = vsel %vm817, 1, 0
        %v838 = vsel %vm818, 1, 0
        %v839 = vsel %vm819, 1, 0
        %v840 = vsel %vm820, 1, 0
        %v841 = vsel %vm821, 1, 0
        %v842 = vsel %vm822, 1, 0
        %v843 = vsel %vm823, 1, 0
        %v844 = vsel %vm824, 1, 0
        %v845 = vsel %vm825, 1, 0
        %v846 = vsel %vm826, 1, 0
        %v847 = vsel %vm827, 1, 0
        %vm848 = vcmp.eq.s32.totalorder %v828, 1
        %vm849 = vcmp.eq.s32.totalorder %v829, 1
        %vm850 = vcmp.eq.s32.totalorder %v830, 1
        %vm851 = vcmp.eq.s32.totalorder %v831, 1
        %vm852 = vcmp.eq.s32.totalorder %v832, 1
        %vm853 = vcmp.eq.s32.totalorder %v833, 1
        %vm854 = vcmp.eq.s32.totalorder %v834, 1
        %vm855 = vcmp.eq.s32.totalorder %v835, 1
        %vm856 = vcmp.eq.s32.totalorder %v836, 1
        %vm857 = vcmp.eq.s32.totalorder %v837, 1
        %vm858 = vcmp.eq.s32.totalorder %v838, 1
        %vm859 = vcmp.eq.s32.totalorder %v839, 1
        %vm860 = vcmp.eq.s32.totalorder %v840, 1
        %vm861 = vcmp.eq.s32.totalorder %v841, 1
        %vm862 = vcmp.eq.s32.totalorder %v842, 1
        %vm863 = vcmp.eq.s32.totalorder %v843, 1
        %vm864 = vcmp.eq.s32.totalorder %v844, 1
        %vm865 = vcmp.eq.s32.totalorder %v845, 1
        %vm866 = vcmp.eq.s32.totalorder %v846, 1
        %vm867 = vcmp.eq.s32.totalorder %v847, 1
        %v868 = vsel %vm848, 0.0, %v681
        %v869 = vsel %vm849, 0.0, %v682
        %v870 = vsel %vm850, 0.0, %v683
        %v871 = vsel %vm851, 0.0, %v684
        %v872 = vsel %vm852, 0.0, %v685
        %v873 = vsel %vm853, 0.0, %v686
        %v874 = vsel %vm854, 0.0, %v687
        %v875 = vsel %vm855, 0.0, %v688
        %v876 = vsel %vm856, 0.0, %v689
        %v877 = vsel %vm857, 0.0, %v690
        %v878 = vsel %vm858, 0.0, %v691
        %v879 = vsel %vm859, 0.0, %v692
        %v880 = vsel %vm860, 0.0, %v693
        %v881 = vsel %vm861, 0.0, %v694
        %v882 = vsel %vm862, 0.0, %v695
        %v883 = vsel %vm863, 0.0, %v696
        %v884 = vsel %vm864, 0.0, %v697
        %v885 = vsel %vm865, 0.0, %v698
        %v886 = vsel %vm866, 0.0, %v699
        %v887 = vsel %vm867, 0.0, %v700
        %vm908 = vcmask 1040384
        %v909 = vrot.slane %v868, 7
        %v910 = vrot.slane %v869, 7
        %v911 = vsel %vm908, %v909, %v910
        %v912 = vrot.slane %v870, 7
        %v913 = vrot.slane %v871, 7
        %v914 = vsel %vm908, %v912, %v913
        %v915 = vrot.slane %v872, 7
        %v916 = vrot.slane %v873, 7
        %v917 = vsel %vm908, %v915, %v916
        %v918 = vrot.slane %v874, 7
        %v919 = vrot.slane %v875, 7
        %v920 = vsel %vm908, %v918, %v919
        %v921 = vrot.slane %v876, 7
        %v922 = vrot.slane %v877, 7
        %v923 = vsel %vm908, %v921, %v922
        %v924 = vrot.slane %v878, 7
        %v925 = vrot.slane %v879, 7
        %v926 = vsel %vm908, %v924, %v925
        %v927 = vrot.slane %v880, 7
        %v928 = vrot.slane %v881, 7
        %v929 = vsel %vm908, %v927, %v928
        %v930 = vrot.slane %v882, 7
        %v931 = vrot.slane %v883, 7
        %v932 = vsel %vm908, %v930, %v931
        %v933 = vrot.slane %v884, 7
        %v934 = vrot.slane %v885, 7
        %v935 = vsel %vm908, %v933, %v934
        %v936 = vrot.slane %v886, 7
        %v937 = vrot.slane %v887, 7
        %v938 = vsel %vm908, %v936, %v937
        %v959 = vsel %vm908, 0.0, %v909
        %v960 = vsel %vm908, 0.0, %v912
        %v961 = vsel %vm908, 0.0, %v915
        %v962 = vsel %vm908, 0.0, %v918
        %v963 = vsel %vm908, 0.0, %v921
        %v964 = vsel %vm908, 0.0, %v924
        %v965 = vsel %vm908, 0.0, %v927
        %v966 = vsel %vm908, 0.0, %v930
        %v967 = vsel %vm908, 0.0, %v933
        %v968 = vsel %vm908, 0.0, %v936
        %vm969 = vcmask 1046528
        %v970 = vrot.slane %v868, 1
        %v971 = vrot.slane %v869, 1
        %v972 = vsel %vm969, %v970, %v971
        %v973 = vrot.slane %v870, 1
        %v974 = vrot.slane %v871, 1
        %v975 = vsel %vm969, %v973, %v974
        %v976 = vrot.slane %v872, 1
        %v977 = vrot.slane %v873, 1
        %v978 = vsel %vm969, %v976, %v977
        %v979 = vrot.slane %v874, 1
        %v980 = vrot.slane %v875, 1
        %v981 = vsel %vm969, %v979, %v980
        %v982 = vrot.slane %v876, 1
        %v983 = vrot.slane %v877, 1
        %v984 = vsel %vm969, %v982, %v983
        %v985 = vrot.slane %v878, 1
        %v986 = vrot.slane %v879, 1
        %v987 = vsel %vm969, %v985, %v986
        %v988 = vrot.slane %v880, 1
        %v989 = vrot.slane %v881, 1
        %v990 = vsel %vm969, %v988, %v989
        %v991 = vrot.slane %v882, 1
        %v992 = vrot.slane %v883, 1
        %v993 = vsel %vm969, %v991, %v992
        %v994 = vrot.slane %v884, 1
        %v995 = vrot.slane %v885, 1
        %v996 = vsel %vm969, %v994, %v995
        %v997 = vrot.slane %v886, 1
        %v998 = vrot.slane %v887, 1
        %v999 = vsel %vm969, %v997, %v998
        %v1020 = vsel %vm969, %v971, 0.0
        %v1021 = vsel %vm969, %v974, 0.0
        %v1022 = vsel %vm969, %v977, 0.0
        %v1023 = vsel %vm969, %v980, 0.0
        %v1024 = vsel %vm969, %v983, 0.0
        %v1025 = vsel %vm969, %v986, 0.0
        %v1026 = vsel %vm969, %v989, 0.0
        %v1027 = vsel %vm969, %v992, 0.0
        %v1028 = vsel %vm969, %v995, 0.0
        %v1029 = vsel %vm969, %v998, 0.0
        %v1030 = vpack.c.bf16 %v911, %v959
        %v1031 = vpack.c.bf16 %v914, %v960
        %v1032 = vpack.c.bf16 %v917, %v961
        %v1033 = vpack.c.bf16 %v920, %v962
        %v1034 = vpack.c.bf16 %v923, %v963
        %v1035 = vpack.c.bf16 %v926, %v964
        %v1036 = vpack.c.bf16 %v929, %v965
        %v1037 = vpack.c.bf16 %v932, %v966
        %v1038 = vld [vmem:[%s5] sm:$0x3]
        %v1039 = vpack.c.bf16 %v869, %v868
        %v1040 = vpack.c.bf16 %v871, %v870
        %v1041 = vpack.c.bf16 %v873, %v872
        %v1042 = vpack.c.bf16 %v875, %v874
        %v1043 = vpack.c.bf16 %v877, %v876
        %v1044 = vpack.c.bf16 %v879, %v878
        %v1045 = vpack.c.bf16 %v881, %v880
        %v1046 = vpack.c.bf16 %v883, %v882
        %s1047 = scalar_lea.vmem %s5, 2
        %v1048 = vld [vmem:[%s1047] sm:$0x3]
        %vm1049 = vcmask 31744
        %v1051 = vsel %vm1049, %v1039, 0
        %v1054 = vsel %vm1049, %v1040, 0
        %v1057 = vsel %vm1049, %v1041, 0
        %v1060 = vsel %vm1049, %v1042, 0
        %v1063 = vsel %vm1049, %v1043, 0
        %v1066 = vsel %vm1049, %v1044, 0
        %v1069 = vsel %vm1049, %v1045, 0
        %v1072 = vsel %vm1049, %v1046, 0
        %vm1074 = vcmask 1041408
        %v1076 = vsel %vm1074, %v1048, 0
        %1078 = vmatprep.subr.bf16.mxu0 0
        %1079 = vmatpush1.bf16.msra.mxu0 %v1076
        %1080 = vmatprep.subr.bf16.mxu0 0
        %1081 = vmatpush1.bf16.msra.mxu0 0
        %1082 = vmatprep.subr.bf16.mxu0 0
        %1083 = vmatpush1.bf16.msra.mxu0 0
        %1084 = vmatprep.subr.bf16.mxu0 0
        %1085 = vmatpush1.bf16.msra.mxu0 0
        %1086 = vmatprep.subr.bf16.mxu0 0
        %1087 = vmatpush1.bf16.msra.mxu0 0
        %1088 = vmatprep.subr.bf16.mxu0 0
        %1089 = vmatpush1.bf16.msra.mxu0 0
        %1090 = vmatprep.subr.bf16.mxu0 0
        %1091 = vmatpush1.bf16.msra.mxu0 0
        %1092 = vmatprep.subr.bf16.mxu0 0
        %1093 = vmatpush1.bf16.msra.mxu0 0
        %1094 = vmatprep.subr.bf16.mxu0 0
        %1095 = vmatpush1.bf16.msra.mxu0 0
        %1096 = vmatprep.subr.bf16.mxu0 0
        %1097 = vmatpush1.bf16.msra.mxu0 0
        %1098 = vmatprep.subr.bf16.mxu0 0
        %1099 = vmatpush1.bf16.msra.mxu0 0
        %1100 = vmatprep.subr.bf16.mxu0 0
        %1101 = vmatpush1.bf16.msra.mxu0 0
        %1102 = vmatprep.subr.bf16.mxu0 0
        %1103 = vmatpush1.bf16.msra.mxu0 0
        %1104 = vmatprep.subr.bf16.mxu0 0
        %1105 = vmatpush1.bf16.msra.mxu0 0
        %1106 = vmatprep.subr.bf16.mxu0 0
        %1107 = vmatpush1.bf16.msra.mxu0 0
        %1108 = vmatprep.subr.bf16.mxu0 0
        %1109 = vmatpush1.bf16.msra.mxu0 0
        %1110 = vmatprep.mubr.bf16.mxu0 0
        %1111 = vmatmul.mubr.bf16.gmra.mrb[0].mxu0 %v1051
        %v1112 = vpop.f32.mrb[0].mxu0
        %v1113 = vadd.f32 0.0, %v1112
        %v1114 = vpop.f32.mrb[0].mxu0
        %v1115 = vpop.f32.mrb[0].mxu0
        %v1116 = vadd.f32 0.0, %v1115
        %v1117 = vpop.f32.mrb[0].mxu0
        %1118 = vmatprep.mubr.bf16.mxu0 0
        %1119 = vmatmul.mubr.bf16.gmra.mrb[0].mxu0 %v1054
        %v1120 = vpop.f32.mrb[0].mxu0
        %v1121 = vadd.f32 0.0, %v1120
        %v1122 = vpop.f32.mrb[0].mxu0
        %v1123 = vpop.f32.mrb[0].mxu0
        %v1124 = vadd.f32 0.0, %v1123
        %v1125 = vpop.f32.mrb[0].mxu0
        %1126 = vmatprep.mubr.bf16.mxu0 0
        %1127 = vmatmul.mubr.bf16.gmra.mrb[0].mxu0 %v1057
        %v1128 = vpop.f32.mrb[0].mxu0
        %v1129 = vadd.f32 0.0, %v1128
        %v1130 = vpop.f32.mrb[0].mxu0
        %v1131 = vpop.f32.mrb[0].mxu0
        %v1132 = vadd.f32 0.0, %v1131
        %v1133 = vpop.f32.mrb[0].mxu0
        %1134 = vmatprep.mubr.bf16.mxu0 0
        %1135 = vmatmul.mubr.bf16.gmra.mrb[0].mxu0 %v1060
        %v1136 = vpop.f32.mrb[0].mxu0
        %v1137 = vadd.f32 0.0, %v1136
        %v1138 = vpop.f32.mrb[0].mxu0
        %v1139 = vpop.f32.mrb[0].mxu0
        %v1140 = vadd.f32 0.0, %v1139
        %v1141 = vpop.f32.mrb[0].mxu0
        %1142 = vmatprep.mubr.bf16.mxu0 0
        %1143 = vmatmul.mubr.bf16.gmra.mrb[0].mxu0 %v1063
        %v1144 = vpop.f32.mrb[0].mxu0
        %v1145 = vadd.f32 0.0, %v1144
        %v1146 = vpop.f32.mrb[0].mxu0
        %v1147 = vpop.f32.mrb[0].mxu0
        %v1148 = vadd.f32 0.0, %v1147
        %v1149 = vpop.f32.mrb[0].mxu0
        %1150 = vmatprep.mubr.bf16.mxu0 0
        %1151 = vmatmul.mubr.bf16.gmra.mrb[0].mxu0 %v1066
        %v1152 = vpop.f32.mrb[0].mxu0
        %v1153 = vadd.f32 0.0, %v1152
        %v1154 = vpop.f32.mrb[0].mxu0
        %v1155 = vpop.f32.mrb[0].mxu0
        %v1156 = vadd.f32 0.0, %v1155
        %v1157 = vpop.f32.mrb[0].mxu0
        %1158 = vmatprep.mubr.bf16.mxu0 0
        %1159 = vmatmul.mubr.bf16.gmra.mrb[0].mxu0 %v1069
        %v1160 = vpop.f32.mrb[0].mxu0
        %v1161 = vadd.f32 0.0, %v1160
        %v1162 = vpop.f32.mrb[0].mxu0
        %v1163 = vpop.f32.mrb[0].mxu0
        %v1164 = vadd.f32 0.0, %v1163
        %v1165 = vpop.f32.mrb[0].mxu0
        %1166 = vmatprep.mubr.bf16.mxu0 0
        %1167 = vmatmul.mubr.bf16.gmra.mrb[0].mxu0 %v1072
        %v1168 = vpop.f32.mrb[0].mxu0
        %v1169 = vadd.f32 0.0, %v1168
        %v1170 = vpop.f32.mrb[0].mxu0
        %v1171 = vpop.f32.mrb[0].mxu0
        %v1172 = vadd.f32 0.0, %v1171
        %v1173 = vpop.f32.mrb[0].mxu0
        %1174 = vdwg.mxu0
        %v1176 = vsel %vm1049, %v1030, 0
        %v1179 = vsel %vm1049, %v1031, 0
        %v1182 = vsel %vm1049, %v1032, 0
        %v1185 = vsel %vm1049, %v1033, 0
        %v1188 = vsel %vm1049, %v1034, 0
        %v1191 = vsel %vm1049, %v1035, 0
        %v1194 = vsel %vm1049, %v1036, 0
        %v1197 = vsel %vm1049, %v1037, 0
        %v1200 = vsel %vm1074, %v1038, 0
        %1202 = vmatprep.subr.bf16.mxu0 0
        %1203 = vmatpush1.bf16.msra.mxu0 %v1200
        %1204 = vmatprep.subr.bf16.mxu0 0
        %1205 = vmatpush1.bf16.msra.mxu0 0
        %1206 = vmatprep.subr.bf16.mxu0 0
        %1207 = vmatpush1.bf16.msra.mxu0 0
        %1208 = vmatprep.subr.bf16.mxu0 0
        %1209 = vmatpush1.bf16.msra.mxu0 0
        %1210 = vmatprep.subr.bf16.mxu0 0
        %1211 = vmatpush1.bf16.msra.mxu0 0
        %1212 = vmatprep.subr.bf16.mxu0 0
        %1213 = vmatpush1.bf16.msra.mxu0 0
        %1214 = vmatprep.subr.bf16.mxu0 0
        %1215 = vmatpush1.bf16.msra.mxu0 0
        %1216 = vmatprep.subr.bf16.mxu0 0
        %1217 = vmatpush1.bf16.msra.mxu0 0
        %1218 = vmatprep.subr.bf16.mxu0 0
        %1219 = vmatpush1.bf16.msra.mxu0 0
        %1220 = vmatprep.subr.bf16.mxu0 0
        %1221 = vmatpush1.bf16.msra.mxu0 0
        %1222 = vmatprep.subr.bf16.mxu0 0
        %1223 = vmatpush1.bf16.msra.mxu0 0
        %1224 = vmatprep.subr.bf16.mxu0 0
        %1225 = vmatpush1.bf16.msra.mxu0 0
        %1226 = vmatprep.subr.bf16.mxu0 0
        %1227 = vmatpush1.bf16.msra.mxu0 0
        %1228 = vmatprep.subr.bf16.mxu0 0
        %1229 = vmatpush1.bf16.msra.mxu0 0
        %1230 = vmatprep.subr.bf16.mxu0 0
        %1231 = vmatpush1.bf16.msra.mxu0 0
        %1232 = vmatprep.subr.bf16.mxu0 0
        %1233 = vmatpush1.bf16.msra.mxu0 0
        %1234 = vmatprep.mubr.bf16.mxu0 0
        %1235 = vmatmul.mubr.bf16.gmra.mrb[0].mxu0 %v1176
        %v1236 = vpop.f32.mrb[0].mxu0
        %v1237 = vadd.f32 %v1113, %v1236
        %v1238 = vpop.f32.mrb[0].mxu0
        %v1239 = vpop.f32.mrb[0].mxu0
        %v1240 = vadd.f32 %v1116, %v1239
        %v1241 = vpop.f32.mrb[0].mxu0
        %1242 = vmatprep.mubr.bf16.mxu0 0
        %1243 = vmatmul.mubr.bf16.gmra.mrb[0].mxu0 %v1179
        %v1244 = vpop.f32.mrb[0].mxu0
        %v1245 = vadd.f32 %v1121, %v1244
        %v1246 = vpop.f32.mrb[0].mxu0
        %v1247 = vpop.f32.mrb[0].mxu0
        %v1248 = vadd.f32 %v1124, %v1247
        %v1249 = vpop.f32.mrb[0].mxu0
        %1250 = vmatprep.mubr.bf16.mxu0 0
        %1251 = vmatmul.mubr.bf16.gmra.mrb[0].mxu0 %v1182
        %v1252 = vpop.f32.mrb[0].mxu0
        %v1253 = vadd.f32 %v1129, %v1252
        %v1254 = vpop.f32.mrb[0].mxu0
        %v1255 = vpop.f32.mrb[0].mxu0
        %v1256 = vadd.f32 %v1132, %v1255
        %v1257 = vpop.f32.mrb[0].mxu0
        %1258 = vmatprep.mubr.bf16.mxu0 0
        %1259 = vmatmul.mubr.bf16.gmra.mrb[0].mxu0 %v1185
        %v1260 = vpop.f32.mrb[0].mxu0
        %v1261 = vadd.f32 %v1137, %v1260
        %v1262 = vpop.f32.mrb[0].mxu0
        %v1263 = vpop.f32.mrb[0].mxu0
        %v1264 = vadd.f32 %v1140, %v1263
        %v1265 = vpop.f32.mrb[0].mxu0
        %1266 = vmatprep.mubr.bf16.mxu0 0
        %1267 = vmatmul.mubr.bf16.gmra.mrb[0].mxu0 %v1188
        %v1268 = vpop.f32.mrb[0].mxu0
        %v1269 = vadd.f32 %v1145, %v1268
        %v1270 = vpop.f32.mrb[0].mxu0
        %v1271 = vpop.f32.mrb[0].mxu0
        %v1272 = vadd.f32 %v1148, %v1271
        %v1273 = vpop.f32.mrb[0].mxu0
        %1274 = vmatprep.mubr.bf16.mxu0 0
        %1275 = vmatmul.mubr.bf16.gmra.mrb[0].mxu0 %v1191
        %v1276 = vpop.f32.mrb[0].mxu0
        %v1277 = vadd.f32 %v1153, %v1276
        %v1278 = vpop.f32.mrb[0].mxu0
        %v1279 = vpop.f32.mrb[0].mxu0
        %v1280 = vadd.f32 %v1156, %v1279
        %v1281 = vpop.f32.mrb[0].mxu0
        %1282 = vmatprep.mubr.bf16.mxu0 0
        %1283 = vmatmul.mubr.bf16.gmra.mrb[0].mxu0 %v1194
        %v1284 = vpop.f32.mrb[0].mxu0
        %v1285 = vadd.f32 %v1161, %v1284
        %v1286 = vpop.f32.mrb[0].mxu0
        %v1287 = vpop.f32.mrb[0].mxu0
        %v1288 = vadd.f32 %v1164, %v1287
        %v1289 = vpop.f32.mrb[0].mxu0
        %1290 = vmatprep.mubr.bf16.mxu0 0
        %1291 = vmatmul.mubr.bf16.gmra.mrb[0].mxu0 %v1197
        %v1292 = vpop.f32.mrb[0].mxu0
        %v1293 = vadd.f32 %v1169, %v1292
        %v1294 = vpop.f32.mrb[0].mxu0
        %v1295 = vpop.f32.mrb[0].mxu0
        %v1296 = vadd.f32 %v1172, %v1295
        %v1297 = vpop.f32.mrb[0].mxu0
        %1298 = vdwg.mxu0
        %v1299 = vpack.c.bf16 %v1020, %v972
        %v1300 = vpack.c.bf16 %v1021, %v975
        %v1301 = vpack.c.bf16 %v1022, %v978
        %v1302 = vpack.c.bf16 %v1023, %v981
        %v1303 = vpack.c.bf16 %v1024, %v984
        %v1304 = vpack.c.bf16 %v1025, %v987
        %v1305 = vpack.c.bf16 %v1026, %v990
        %v1306 = vpack.c.bf16 %v1027, %v993
        %s1307 = scalar_lea.vmem %s5, 4
        %v1308 = vld [vmem:[%s1307] sm:$0x3]
        %v1310 = vsel %vm1049, %v1299, 0
        %v1313 = vsel %vm1049, %v1300, 0
        %v1316 = vsel %vm1049, %v1301, 0
        %v1319 = vsel %vm1049, %v1302, 0
        %v1322 = vsel %vm1049, %v1303, 0
        %v1325 = vsel %vm1049, %v1304, 0
        %v1328 = vsel %vm1049, %v1305, 0
        %v1331 = vsel %vm1049, %v1306, 0
        %v1334 = vsel %vm1074, %v1308, 0
        %1336 = vmatprep.subr.bf16.mxu0 0
        %1337 = vmatpush1.bf16.msra.mxu0 %v1334
        %1338 = vmatprep.subr.bf16.mxu0 0
        %1339 = vmatpush1.bf16.msra.mxu0 0
        %1340 = vmatprep.subr.bf16.mxu0 0
        %1341 = vmatpush1.bf16.msra.mxu0 0
        %1342 = vmatprep.subr.bf16.mxu0 0
        %1343 = vmatpush1.bf16.msra.mxu0 0
        %1344 = vmatprep.subr.bf16.mxu0 0
        %1345 = vmatpush1.bf16.msra.mxu0 0
        %1346 = vmatprep.subr.bf16.mxu0 0
        %1347 = vmatpush1.bf16.msra.mxu0 0
        %1348 = vmatprep.subr.bf16.mxu0 0
        %1349 = vmatpush1.bf16.msra.mxu0 0
        %1350 = vmatprep.subr.bf16.mxu0 0
        %1351 = vmatpush1.bf16.msra.mxu0 0
        %1352 = vmatprep.subr.bf16.mxu0 0
        %1353 = vmatpush1.bf16.msra.mxu0 0
        %1354 = vmatprep.subr.bf16.mxu0 0
        %1355 = vmatpush1.bf16.msra.mxu0 0
        %1356 = vmatprep.subr.bf16.mxu0 0
        %1357 = vmatpush1.bf16.msra.mxu0 0
        %1358 = vmatprep.subr.bf16.mxu0 0
        %1359 = vmatpush1.bf16.msra.mxu0 0
        %1360 = vmatprep.subr.bf16.mxu0 0
        %1361 = vmatpush1.bf16.msra.mxu0 0
        %1362 = vmatprep.subr.bf16.mxu0 0
        %1363 = vmatpush1.bf16.msra.mxu0 0
        %1364 = vmatprep.subr.bf16.mxu0 0
        %1365 = vmatpush1.bf16.msra.mxu0 0
        %1366 = vmatprep.subr.bf16.mxu0 0
        %1367 = vmatpush1.bf16.msra.mxu0 0
        %1368 = vmatprep.mubr.bf16.mxu0 0
        %1369 = vmatmul.mubr.bf16.gmra.mrb[0].mxu0 %v1310
        %v1370 = vpop.f32.mrb[0].mxu0
        %v1371 = vadd.f32 0.0, %v1370
        %v1372 = vpop.f32.mrb[0].mxu0
        %v1373 = vpop.f32.mrb[0].mxu0
        %v1374 = vadd.f32 0.0, %v1373
        %v1375 = vpop.f32.mrb[0].mxu0
        %1376 = vmatprep.mubr.bf16.mxu0 0
        %1377 = vmatmul.mubr.bf16.gmra.mrb[0].mxu0 %v1313
        %v1378 = vpop.f32.mrb[0].mxu0
        %v1379 = vadd.f32 0.0, %v1378
        %v1380 = vpop.f32.mrb[0].mxu0
        %v1381 = vpop.f32.mrb[0].mxu0
        %v1382 = vadd.f32 0.0, %v1381
        %v1383 = vpop.f32.mrb[0].mxu0
        %1384 = vmatprep.mubr.bf16.mxu0 0
        %1385 = vmatmul.mubr.bf16.gmra.mrb[0].mxu0 %v1316
        %v1386 = vpop.f32.mrb[0].mxu0
        %v1387 = vadd.f32 0.0, %v1386
        %v1388 = vpop.f32.mrb[0].mxu0
        %v1389 = vpop.f32.mrb[0].mxu0
        %v1390 = vadd.f32 0.0, %v1389
        %v1391 = vpop.f32.mrb[0].mxu0
        %1392 = vmatprep.mubr.bf16.mxu0 0
        %1393 = vmatmul.mubr.bf16.gmra.mrb[0].mxu0 %v1319
        %v1394 = vpop.f32.mrb[0].mxu0
        %v1395 = vadd.f32 0.0, %v1394
        %v1396 = vpop.f32.mrb[0].mxu0
        %v1397 = vpop.f32.mrb[0].mxu0
        %v1398 = vadd.f32 0.0, %v1397
        %v1399 = vpop.f32.mrb[0].mxu0
        %1400 = vmatprep.mubr.bf16.mxu0 0
        %1401 = vmatmul.mubr.bf16.gmra.mrb[0].mxu0 %v1322
        %v1402 = vpop.f32.mrb[0].mxu0
        %v1403 = vadd.f32 0.0, %v1402
        %v1404 = vpop.f32.mrb[0].mxu0
        %v1405 = vpop.f32.mrb[0].mxu0
        %v1406 = vadd.f32 0.0, %v1405
        %v1407 = vpop.f32.mrb[0].mxu0
        %1408 = vmatprep.mubr.bf16.mxu0 0
        %1409 = vmatmul.mubr.bf16.gmra.mrb[0].mxu0 %v1325
        %v1410 = vpop.f32.mrb[0].mxu0
        %v1411 = vadd.f32 0.0, %v1410
        %v1412 = vpop.f32.mrb[0].mxu0
        %v1413 = vpop.f32.mrb[0].mxu0
        %v1414 = vadd.f32 0.0, %v1413
        %v1415 = vpop.f32.mrb[0].mxu0
        %1416 = vmatprep.mubr.bf16.mxu0 0
        %1417 = vmatmul.mubr.bf16.gmra.mrb[0].mxu0 %v1328
        %v1418 = vpop.f32.mrb[0].mxu0
        %v1419 = vadd.f32 0.0, %v1418
        %v1420 = vpop.f32.mrb[0].mxu0
        %v1421 = vpop.f32.mrb[0].mxu0
        %v1422 = vadd.f32 0.0, %v1421
        %v1423 = vpop.f32.mrb[0].mxu0
        %1424 = vmatprep.mubr.bf16.mxu0 0
        %1425 = vmatmul.mubr.bf16.gmra.mrb[0].mxu0 %v1331
        %v1426 = vpop.f32.mrb[0].mxu0
        %v1427 = vadd.f32 0.0, %v1426
        %v1428 = vpop.f32.mrb[0].mxu0
        %v1429 = vpop.f32.mrb[0].mxu0
        %v1430 = vadd.f32 0.0, %v1429
        %v1431 = vpop.f32.mrb[0].mxu0
        %1432 = vdwg.mxu0
        %v1433 = vadd.f32 %v1237, %v1371
        %v1434 = vadd.f32 %v1240, %v1374
        %v1435 = vadd.f32 %v1245, %v1379
        %v1436 = vadd.f32 %v1248, %v1382
        %v1437 = vadd.f32 %v1253, %v1387
        %v1438 = vadd.f32 %v1256, %v1390
        %v1439 = vadd.f32 %v1261, %v1395
        %v1440 = vadd.f32 %v1264, %v1398
        %v1441 = vadd.f32 %v1269, %v1403
        %v1442 = vadd.f32 %v1272, %v1406
        %v1443 = vadd.f32 %v1277, %v1411
        %v1444 = vadd.f32 %v1280, %v1414
        %v1445 = vadd.f32 %v1285, %v1419
        %v1446 = vadd.f32 %v1288, %v1422
        %v1447 = vadd.f32 %v1293, %v1427
        %v1448 = vadd.f32 %v1296, %v1430
        %v1449 = vpack.c.bf16 %v935, %v967
        %s1450 = scalar_lea.vmem %s5, 6
        %v1451 = vld [vmem:[%s1450] sm:$0x3]
        %v1453 = vsel %vm1049, %v1449, 0
        %v1456 = vsel %vm1074, %v1451, 0
        %1458 = vmatprep.subr.bf16.mxu0 0
        %1459 = vmatpush1.bf16.msra.mxu0 %v1456
        %1460 = vmatprep.subr.bf16.mxu0 0
        %1461 = vmatpush1.bf16.msra.mxu0 0
        %1462 = vmatprep.subr.bf16.mxu0 0
        %1463 = vmatpush1.bf16.msra.mxu0 0
        %1464 = vmatprep.subr.bf16.mxu0 0
        %1465 = vmatpush1.bf16.msra.mxu0 0
        %1466 = vmatprep.subr.bf16.mxu0 0
        %1467 = vmatpush1.bf16.msra.mxu0 0
        %1468 = vmatprep.subr.bf16.mxu0 0
        %1469 = vmatpush1.bf16.msra.mxu0 0
        %1470 = vmatprep.subr.bf16.mxu0 0
        %1471 = vmatpush1.bf16.msra.mxu0 0
        %1472 = vmatprep.subr.bf16.mxu0 0
        %1473 = vmatpush1.bf16.msra.mxu0 0
        %1474 = vmatprep.subr.bf16.mxu0 0
        %1475 = vmatpush1.bf16.msra.mxu0 0
        %1476 = vmatprep.subr.bf16.mxu0 0
        %1477 = vmatpush1.bf16.msra.mxu0 0
        %1478 = vmatprep.subr.bf16.mxu0 0
        %1479 = vmatpush1.bf16.msra.mxu0 0
        %1480 = vmatprep.subr.bf16.mxu0 0
        %1481 = vmatpush1.bf16.msra.mxu0 0
        %1482 = vmatprep.subr.bf16.mxu0 0
        %1483 = vmatpush1.bf16.msra.mxu0 0
        %1484 = vmatprep.subr.bf16.mxu0 0
        %1485 = vmatpush1.bf16.msra.mxu0 0
        %1486 = vmatprep.subr.bf16.mxu0 0
        %1487 = vmatpush1.bf16.msra.mxu0 0
        %1488 = vmatprep.subr.bf16.mxu0 0
        %1489 = vmatpush1.bf16.msra.mxu0 0
        %1490 = vmatprep.mubr.bf16.mxu0 0
        %1491 = vmatmul.mubr.bf16.gmra.mrb[0].mxu0 %v1179
        %v1492 = vpop.f32.mrb[0].mxu0
        %v1493 = vadd.f32 0.0, %v1492
        %v1494 = vpop.f32.mrb[0].mxu0
        %v1495 = vpop.f32.mrb[0].mxu0
        %v1496 = vadd.f32 0.0, %v1495
        %v1497 = vpop.f32.mrb[0].mxu0
        %1498 = vmatprep.mubr.bf16.mxu0 0
        %1499 = vmatmul.mubr.bf16.gmra.mrb[0].mxu0 %v1182
        %v1500 = vpop.f32.mrb[0].mxu0
        %v1501 = vadd.f32 0.0, %v1500
        %v1502 = vpop.f32.mrb[0].mxu0
        %v1503 = vpop.f32.mrb[0].mxu0
        %v1504 = vadd.f32 0.0, %v1503
        %v1505 = vpop.f32.mrb[0].mxu0
        %1506 = vmatprep.mubr.bf16.mxu0 0
        %1507 = vmatmul.mubr.bf16.gmra.mrb[0].mxu0 %v1185
        %v1508 = vpop.f32.mrb[0].mxu0
        %v1509 = vadd.f32 0.0, %v1508
        %v1510 = vpop.f32.mrb[0].mxu0
        %v1511 = vpop.f32.mrb[0].mxu0
        %v1512 = vadd.f32 0.0, %v1511
        %v1513 = vpop.f32.mrb[0].mxu0
        %1514 = vmatprep.mubr.bf16.mxu0 0
        %1515 = vmatmul.mubr.bf16.gmra.mrb[0].mxu0 %v1188
        %v1516 = vpop.f32.mrb[0].mxu0
        %v1517 = vadd.f32 0.0, %v1516
        %v1518 = vpop.f32.mrb[0].mxu0
        %v1519 = vpop.f32.mrb[0].mxu0
        %v1520 = vadd.f32 0.0, %v1519
        %v1521 = vpop.f32.mrb[0].mxu0
        %1522 = vmatprep.mubr.bf16.mxu0 0
        %1523 = vmatmul.mubr.bf16.gmra.mrb[0].mxu0 %v1191
        %v1524 = vpop.f32.mrb[0].mxu0
        %v1525 = vadd.f32 0.0, %v1524
        %v1526 = vpop.f32.mrb[0].mxu0
        %v1527 = vpop.f32.mrb[0].mxu0
        %v1528 = vadd.f32 0.0, %v1527
        %v1529 = vpop.f32.mrb[0].mxu0
        %1530 = vmatprep.mubr.bf16.mxu0 0
        %1531 = vmatmul.mubr.bf16.gmra.mrb[0].mxu0 %v1194
        %v1532 = vpop.f32.mrb[0].mxu0
        %v1533 = vadd.f32 0.0, %v1532
        %v1534 = vpop.f32.mrb[0].mxu0
        %v1535 = vpop.f32.mrb[0].mxu0
        %v1536 = vadd.f32 0.0, %v1535
        %v1537 = vpop.f32.mrb[0].mxu0
        %1538 = vmatprep.mubr.bf16.mxu0 0
        %1539 = vmatmul.mubr.bf16.gmra.mrb[0].mxu0 %v1197
        %v1540 = vpop.f32.mrb[0].mxu0
        %v1541 = vadd.f32 0.0, %v1540
        %v1542 = vpop.f32.mrb[0].mxu0
        %v1543 = vpop.f32.mrb[0].mxu0
        %v1544 = vadd.f32 0.0, %v1543
        %v1545 = vpop.f32.mrb[0].mxu0
        %1546 = vmatprep.mubr.bf16.mxu0 0
        %1547 = vmatmul.mubr.bf16.gmra.mrb[0].mxu0 %v1453
        %v1548 = vpop.f32.mrb[0].mxu0
        %v1549 = vadd.f32 0.0, %v1548
        %v1550 = vpop.f32.mrb[0].mxu0
        %v1551 = vpop.f32.mrb[0].mxu0
        %v1552 = vadd.f32 0.0, %v1551
        %v1553 = vpop.f32.mrb[0].mxu0
        %1554 = vdwg.mxu0
        %v1555 = vadd.f32 %v1433, %v1493
        %v1556 = vadd.f32 %v1434, %v1496
        %v1557 = vadd.f32 %v1435, %v1501
        %v1558 = vadd.f32 %v1436, %v1504
        %v1559 = vadd.f32 %v1437, %v1509
        %v1560 = vadd.f32 %v1438, %v1512
        %v1561 = vadd.f32 %v1439, %v1517
        %v1562 = vadd.f32 %v1440, %v1520
        %v1563 = vadd.f32 %v1441, %v1525
        %v1564 = vadd.f32 %v1442, %v1528
        %v1565 = vadd.f32 %v1443, %v1533
        %v1566 = vadd.f32 %v1444, %v1536
        %v1567 = vadd.f32 %v1445, %v1541
        %v1568 = vadd.f32 %v1446, %v1544
        %v1569 = vadd.f32 %v1447, %v1549
        %v1570 = vadd.f32 %v1448, %v1552
        %v1571 = vpack.c.bf16 %v885, %v884
        %s1572 = scalar_lea.vmem %s5, 8
        %v1573 = vld [vmem:[%s1572] sm:$0x3]
        %v1575 = vsel %vm1049, %v1571, 0
        %v1578 = vsel %vm1074, %v1573, 0
        %1580 = vmatprep.subr.bf16.mxu0 0
        %1581 = vmatpush1.bf16.msra.mxu0 %v1578
        %1582 = vmatprep.subr.bf16.mxu0 0
        %1583 = vmatpush1.bf16.msra.mxu0 0
        %1584 = vmatprep.subr.bf16.mxu0 0
        %1585 = vmatpush1.bf16.msra.mxu0 0
        %1586 = vmatprep.subr.bf16.mxu0 0
        %1587 = vmatpush1.bf16.msra.mxu0 0
        %1588 = vmatprep.subr.bf16.mxu0 0
        %1589 = vmatpush1.bf16.msra.mxu0 0
        %1590 = vmatprep.subr.bf16.mxu0 0
        %1591 = vmatpush1.bf16.msra.mxu0 0
        %1592 = vmatprep.subr.bf16.mxu0 0
        %1593 = vmatpush1.bf16.msra.mxu0 0
        %1594 = vmatprep.subr.bf16.mxu0 0
        %1595 = vmatpush1.bf16.msra.mxu0 0
        %1596 = vmatprep.subr.bf16.mxu0 0
        %1597 = vmatpush1.bf16.msra.mxu0 0
        %1598 = vmatprep.subr.bf16.mxu0 0
        %1599 = vmatpush1.bf16.msra.mxu0 0
        %1600 = vmatprep.subr.bf16.mxu0 0
        %1601 = vmatpush1.bf16.msra.mxu0 0
        %1602 = vmatprep.subr.bf16.mxu0 0
        %1603 = vmatpush1.bf16.msra.mxu0 0
        %1604 = vmatprep.subr.bf16.mxu0 0
        %1605 = vmatpush1.bf16.msra.mxu0 0
        %1606 = vmatprep.subr.bf16.mxu0 0
        %1607 = vmatpush1.bf16.msra.mxu0 0
        %1608 = vmatprep.subr.bf16.mxu0 0
        %1609 = vmatpush1.bf16.msra.mxu0 0
        %1610 = vmatprep.subr.bf16.mxu0 0
        %1611 = vmatpush1.bf16.msra.mxu0 0
        %1612 = vmatprep.mubr.bf16.mxu0 0
        %1613 = vmatmul.mubr.bf16.gmra.mrb[0].mxu0 %v1054
        %v1614 = vpop.f32.mrb[0].mxu0
        %v1615 = vadd.f32 0.0, %v1614
        %v1616 = vpop.f32.mrb[0].mxu0
        %v1617 = vpop.f32.mrb[0].mxu0
        %v1618 = vadd.f32 0.0, %v1617
        %v1619 = vpop.f32.mrb[0].mxu0
        %1620 = vmatprep.mubr.bf16.mxu0 0
        %1621 = vmatmul.mubr.bf16.gmra.mrb[0].mxu0 %v1057
        %v1622 = vpop.f32.mrb[0].mxu0
        %v1623 = vadd.f32 0.0, %v1622
        %v1624 = vpop.f32.mrb[0].mxu0
        %v1625 = vpop.f32.mrb[0].mxu0
        %v1626 = vadd.f32 0.0, %v1625
        %v1627 = vpop.f32.mrb[0].mxu0
        %1628 = vmatprep.mubr.bf16.mxu0 0
        %1629 = vmatmul.mubr.bf16.gmra.mrb[0].mxu0 %v1060
        %v1630 = vpop.f32.mrb[0].mxu0
        %v1631 = vadd.f32 0.0, %v1630
        %v1632 = vpop.f32.mrb[0].mxu0
        %v1633 = vpop.f32.mrb[0].mxu0
        %v1634 = vadd.f32 0.0, %v1633
        %v1635 = vpop.f32.mrb[0].mxu0
        %1636 = vmatprep.mubr.bf16.mxu0 0
        %1637 = vmatmul.mubr.bf16.gmra.mrb[0].mxu0 %v1063
        %v1638 = vpop.f32.mrb[0].mxu0
        %v1639 = vadd.f32 0.0, %v1638
        %v1640 = vpop.f32.mrb[0].mxu0
        %v1641 = vpop.f32.mrb[0].mxu0
        %v1642 = vadd.f32 0.0, %v1641
        %v1643 = vpop.f32.mrb[0].mxu0
        %1644 = vmatprep.mubr.bf16.mxu0 0
        %1645 = vmatmul.mubr.bf16.gmra.mrb[0].mxu0 %v1066
        %v1646 = vpop.f32.mrb[0].mxu0
        %v1647 = vadd.f32 0.0, %v1646
        %v1648 = vpop.f32.mrb[0].mxu0
        %v1649 = vpop.f32.mrb[0].mxu0
        %v1650 = vadd.f32 0.0, %v1649
        %v1651 = vpop.f32.mrb[0].mxu0
        %1652 = vmatprep.mubr.bf16.mxu0 0
        %1653 = vmatmul.mubr.bf16.gmra.mrb[0].mxu0 %v1069
        %v1654 = vpop.f32.mrb[0].mxu0
        %v1655 = vadd.f32 0.0, %v1654
        %v1656 = vpop.f32.mrb[0].mxu0
        %v1657 = vpop.f32.mrb[0].mxu0
        %v1658 = vadd.f32 0.0, %v1657
        %v1659 = vpop.f32.mrb[0].mxu0
        %1660 = vmatprep.mubr.bf16.mxu0 0
        %1661 = vmatmul.mubr.bf16.gmra.mrb[0].mxu0 %v1072
        %v1662 = vpop.f32.mrb[0].mxu0
        %v1663 = vadd.f32 0.0, %v1662
        %v1664 = vpop.f32.mrb[0].mxu0
        %v1665 = vpop.f32.mrb[0].mxu0
        %v1666 = vadd.f32 0.0, %v1665
        %v1667 = vpop.f32.mrb[0].mxu0
        %1668 = vmatprep.mubr.bf16.mxu0 0
        %1669 = vmatmul.mubr.bf16.gmra.mrb[0].mxu0 %v1575
        %v1670 = vpop.f32.mrb[0].mxu0
        %v1671 = vadd.f32 0.0, %v1670
        %v1672 = vpop.f32.mrb[0].mxu0
        %v1673 = vpop.f32.mrb[0].mxu0
        %v1674 = vadd.f32 0.0, %v1673
        %v1675 = vpop.f32.mrb[0].mxu0
        %1676 = vdwg.mxu0
        %v1677 = vadd.f32 %v1555, %v1615
        %v1678 = vadd.f32 %v1556, %v1618
        %v1679 = vadd.f32 %v1557, %v1623
        %v1680 = vadd.f32 %v1558, %v1626
        %v1681 = vadd.f32 %v1559, %v1631
        %v1682 = vadd.f32 %v1560, %v1634
        %v1683 = vadd.f32 %v1561, %v1639
        %v1684 = vadd.f32 %v1562, %v1642
        %v1685 = vadd.f32 %v1563, %v1647
        %v1686 = vadd.f32 %v1564, %v1650
        %v1687 = vadd.f32 %v1565, %v1655
        %v1688 = vadd.f32 %v1566, %v1658
        %v1689 = vadd.f32 %v1567, %v1663
        %v1690 = vadd.f32 %v1568, %v1666
        %v1691 = vadd.f32 %v1569, %v1671
        %v1692 = vadd.f32 %v1570, %v1674
        %v1693 = vpack.c.bf16 %v1028, %v996
        %s1694 = scalar_lea.vmem %s5, 10
        %v1695 = vld [vmem:[%s1694] sm:$0x3]
        %v1697 = vsel %vm1049, %v1693, 0
        %v1700 = vsel %vm1074, %v1695, 0
        %1702 = vmatprep.subr.bf16.mxu0 0
        %1703 = vmatpush1.bf16.msra.mxu0 %v1700
        %1704 = vmatprep.subr.bf16.mxu0 0
        %1705 = vmatpush1.bf16.msra.mxu0 0
        %1706 = vmatprep.subr.bf16.mxu0 0
        %1707 = vmatpush1.bf16.msra.mxu0 0
        %1708 = vmatprep.subr.bf16.mxu0 0
        %1709 = vmatpush1.bf16.msra.mxu0 0
        %1710 = vmatprep.subr.bf16.mxu0 0
        %1711 = vmatpush1.bf16.msra.mxu0 0
        %1712 = vmatprep.subr.bf16.mxu0 0
        %1713 = vmatpush1.bf16.msra.mxu0 0
        %1714 = vmatprep.subr.bf16.mxu0 0
        %1715 = vmatpush1.bf16.msra.mxu0 0
        %1716 = vmatprep.subr.bf16.mxu0 0
        %1717 = vmatpush1.bf16.msra.mxu0 0
        %1718 = vmatprep.subr.bf16.mxu0 0
        %1719 = vmatpush1.bf16.msra.mxu0 0
        %1720 = vmatprep.subr.bf16.mxu0 0
        %1721 = vmatpush1.bf16.msra.mxu0 0
        %1722 = vmatprep.subr.bf16.mxu0 0
        %1723 = vmatpush1.bf16.msra.mxu0 0
        %1724 = vmatprep.subr.bf16.mxu0 0
        %1725 = vmatpush1.bf16.msra.mxu0 0
        %1726 = vmatprep.subr.bf16.mxu0 0
        %1727 = vmatpush1.bf16.msra.mxu0 0
        %1728 = vmatprep.subr.bf16.mxu0 0
        %1729 = vmatpush1.bf16.msra.mxu0 0
        %1730 = vmatprep.subr.bf16.mxu0 0
        %1731 = vmatpush1.bf16.msra.mxu0 0
        %1732 = vmatprep.subr.bf16.mxu0 0
        %1733 = vmatpush1.bf16.msra.mxu0 0
        %1734 = vmatprep.mubr.bf16.mxu0 0
        %1735 = vmatmul.mubr.bf16.gmra.mrb[0].mxu0 %v1313
        %v1736 = vpop.f32.mrb[0].mxu0
        %v1737 = vadd.f32 0.0, %v1736
        %v1738 = vpop.f32.mrb[0].mxu0
        %v1739 = vpop.f32.mrb[0].mxu0
        %v1740 = vadd.f32 0.0, %v1739
        %v1741 = vpop.f32.mrb[0].mxu0
        %1742 = vmatprep.mubr.bf16.mxu0 0
        %1743 = vmatmul.mubr.bf16.gmra.mrb[0].mxu0 %v1316
        %v1744 = vpop.f32.mrb[0].mxu0
        %v1745 = vadd.f32 0.0, %v1744
        %v1746 = vpop.f32.mrb[0].mxu0
        %v1747 = vpop.f32.mrb[0].mxu0
        %v1748 = vadd.f32 0.0, %v1747
        %v1749 = vpop.f32.mrb[0].mxu0
        %1750 = vmatprep.mubr.bf16.mxu0 0
        %1751 = vmatmul.mubr.bf16.gmra.mrb[0].mxu0 %v1319
        %v1752 = vpop.f32.mrb[0].mxu0
        %v1753 = vadd.f32 0.0, %v1752
        %v1754 = vpop.f32.mrb[0].mxu0
        %v1755 = vpop.f32.mrb[0].mxu0
        %v1756 = vadd.f32 0.0, %v1755
        %v1757 = vpop.f32.mrb[0].mxu0
        %1758 = vmatprep.mubr.bf16.mxu0 0
        %1759 = vmatmul.mubr.bf16.gmra.mrb[0].mxu0 %v1322
        %v1760 = vpop.f32.mrb[0].mxu0
        %v1761 = vadd.f32 0.0, %v1760
        %v1762 = vpop.f32.mrb[0].mxu0
        %v1763 = vpop.f32.mrb[0].mxu0
        %v1764 = vadd.f32 0.0, %v1763
        %v1765 = vpop.f32.mrb[0].mxu0
        %1766 = vmatprep.mubr.bf16.mxu0 0
        %1767 = vmatmul.mubr.bf16.gmra.mrb[0].mxu0 %v1325
        %v1768 = vpop.f32.mrb[0].mxu0
        %v1769 = vadd.f32 0.0, %v1768
        %v1770 = vpop.f32.mrb[0].mxu0
        %v1771 = vpop.f32.mrb[0].mxu0
        %v1772 = vadd.f32 0.0, %v1771
        %v1773 = vpop.f32.mrb[0].mxu0
        %1774 = vmatprep.mubr.bf16.mxu0 0
        %1775 = vmatmul.mubr.bf16.gmra.mrb[0].mxu0 %v1328
        %v1776 = vpop.f32.mrb[0].mxu0
        %v1777 = vadd.f32 0.0, %v1776
        %v1778 = vpop.f32.mrb[0].mxu0
        %v1779 = vpop.f32.mrb[0].mxu0
        %v1780 = vadd.f32 0.0, %v1779
        %v1781 = vpop.f32.mrb[0].mxu0
        %1782 = vmatprep.mubr.bf16.mxu0 0
        %1783 = vmatmul.mubr.bf16.gmra.mrb[0].mxu0 %v1331
        %v1784 = vpop.f32.mrb[0].mxu0
        %v1785 = vadd.f32 0.0, %v1784
        %v1786 = vpop.f32.mrb[0].mxu0
        %v1787 = vpop.f32.mrb[0].mxu0
        %v1788 = vadd.f32 0.0, %v1787
        %v1789 = vpop.f32.mrb[0].mxu0
        %1790 = vmatprep.mubr.bf16.mxu0 0
        %1791 = vmatmul.mubr.bf16.gmra.mrb[0].mxu0 %v1697
        %v1792 = vpop.f32.mrb[0].mxu0
        %v1793 = vadd.f32 0.0, %v1792
        %v1794 = vpop.f32.mrb[0].mxu0
        %v1795 = vpop.f32.mrb[0].mxu0
        %v1796 = vadd.f32 0.0, %v1795
        %v1797 = vpop.f32.mrb[0].mxu0
        %1798 = vdwg.mxu0
        %v1799 = vadd.f32 %v1677, %v1737
        %v1800 = vadd.f32 %v1678, %v1740
        %v1801 = vadd.f32 %v1679, %v1745
        %v1802 = vadd.f32 %v1680, %v1748
        %v1803 = vadd.f32 %v1681, %v1753
        %v1804 = vadd.f32 %v1682, %v1756
        %v1805 = vadd.f32 %v1683, %v1761
        %v1806 = vadd.f32 %v1684, %v1764
        %v1807 = vadd.f32 %v1685, %v1769
        %v1808 = vadd.f32 %v1686, %v1772
        %v1809 = vadd.f32 %v1687, %v1777
        %v1810 = vadd.f32 %v1688, %v1780
        %v1811 = vadd.f32 %v1689, %v1785
        %v1812 = vadd.f32 %v1690, %v1788
        %v1813 = vadd.f32 %v1691, %v1793
        %v1814 = vadd.f32 %v1692, %v1796
        %v1815 = vpack.c.bf16 %v938, %v968
        %s1816 = scalar_lea.vmem %s5, 12
        %v1817 = vld [vmem:[%s1816] sm:$0x3]
        %v1819 = vsel %vm1049, %v1815, 0
        %v1822 = vsel %vm1074, %v1817, 0
        %1824 = vmatprep.subr.bf16.mxu0 0
        %1825 = vmatpush1.bf16.msra.mxu0 %v1822
        %1826 = vmatprep.subr.bf16.mxu0 0
        %1827 = vmatpush1.bf16.msra.mxu0 0
        %1828 = vmatprep.subr.bf16.mxu0 0
        %1829 = vmatpush1.bf16.msra.mxu0 0
        %1830 = vmatprep.subr.bf16.mxu0 0
        %1831 = vmatpush1.bf16.msra.mxu0 0
        %1832 = vmatprep.subr.bf16.mxu0 0
        %1833 = vmatpush1.bf16.msra.mxu0 0
        %1834 = vmatprep.subr.bf16.mxu0 0
        %1835 = vmatpush1.bf16.msra.mxu0 0
        %1836 = vmatprep.subr.bf16.mxu0 0
        %1837 = vmatpush1.bf16.msra.mxu0 0
        %1838 = vmatprep.subr.bf16.mxu0 0
        %1839 = vmatpush1.bf16.msra.mxu0 0
        %1840 = vmatprep.subr.bf16.mxu0 0
        %1841 = vmatpush1.bf16.msra.mxu0 0
        %1842 = vmatprep.subr.bf16.mxu0 0
        %1843 = vmatpush1.bf16.msra.mxu0 0
        %1844 = vmatprep.subr.bf16.mxu0 0
        %1845 = vmatpush1.bf16.msra.mxu0 0
        %1846 = vmatprep.subr.bf16.mxu0 0
        %1847 = vmatpush1.bf16.msra.mxu0 0
        %1848 = vmatprep.subr.bf16.mxu0 0
        %1849 = vmatpush1.bf16.msra.mxu0 0
        %1850 = vmatprep.subr.bf16.mxu0 0
        %1851 = vmatpush1.bf16.msra.mxu0 0
        %1852 = vmatprep.subr.bf16.mxu0 0
        %1853 = vmatpush1.bf16.msra.mxu0 0
        %1854 = vmatprep.subr.bf16.mxu0 0
        %1855 = vmatpush1.bf16.msra.mxu0 0
        %1856 = vmatprep.mubr.bf16.mxu0 0
        %1857 = vmatmul.mubr.bf16.gmra.mrb[0].mxu0 %v1182
        %v1858 = vpop.f32.mrb[0].mxu0
        %v1859 = vadd.f32 0.0, %v1858
        %v1860 = vpop.f32.mrb[0].mxu0
        %v1861 = vpop.f32.mrb[0].mxu0
        %v1862 = vadd.f32 0.0, %v1861
        %v1863 = vpop.f32.mrb[0].mxu0
        %1864 = vmatprep.mubr.bf16.mxu0 0
        %1865 = vmatmul.mubr.bf16.gmra.mrb[0].mxu0 %v1185
        %v1866 = vpop.f32.mrb[0].mxu0
        %v1867 = vadd.f32 0.0, %v1866
        %v1868 = vpop.f32.mrb[0].mxu0
        %v1869 = vpop.f32.mrb[0].mxu0
        %v1870 = vadd.f32 0.0, %v1869
        %v1871 = vpop.f32.mrb[0].mxu0
        %1872 = vmatprep.mubr.bf16.mxu0 0
        %1873 = vmatmul.mubr.bf16.gmra.mrb[0].mxu0 %v1188
        %v1874 = vpop.f32.mrb[0].mxu0
        %v1875 = vadd.f32 0.0, %v1874
        %v1876 = vpop.f32.mrb[0].mxu0
        %v1877 = vpop.f32.mrb[0].mxu0
        %v1878 = vadd.f32 0.0, %v1877
        %v1879 = vpop.f32.mrb[0].mxu0
        %1880 = vmatprep.mubr.bf16.mxu0 0
        %1881 = vmatmul.mubr.bf16.gmra.mrb[0].mxu0 %v1191
        %v1882 = vpop.f32.mrb[0].mxu0
        %v1883 = vadd.f32 0.0, %v1882
        %v1884 = vpop.f32.mrb[0].mxu0
        %v1885 = vpop.f32.mrb[0].mxu0
        %v1886 = vadd.f32 0.0, %v1885
        %v1887 = vpop.f32.mrb[0].mxu0
        %1888 = vmatprep.mubr.bf16.mxu0 0
        %1889 = vmatmul.mubr.bf16.gmra.mrb[0].mxu0 %v1194
        %v1890 = vpop.f32.mrb[0].mxu0
        %v1891 = vadd.f32 0.0, %v1890
        %v1892 = vpop.f32.mrb[0].mxu0
        %v1893 = vpop.f32.mrb[0].mxu0
        %v1894 = vadd.f32 0.0, %v1893
        %v1895 = vpop.f32.mrb[0].mxu0
        %1896 = vmatprep.mubr.bf16.mxu0 0
        %1897 = vmatmul.mubr.bf16.gmra.mrb[0].mxu0 %v1197
        %v1898 = vpop.f32.mrb[0].mxu0
        %v1899 = vadd.f32 0.0, %v1898
        %v1900 = vpop.f32.mrb[0].mxu0
        %v1901 = vpop.f32.mrb[0].mxu0
        %v1902 = vadd.f32 0.0, %v1901
        %v1903 = vpop.f32.mrb[0].mxu0
        %1904 = vmatprep.mubr.bf16.mxu0 0
        %1905 = vmatmul.mubr.bf16.gmra.mrb[0].mxu0 %v1453
        %v1906 = vpop.f32.mrb[0].mxu0
        %v1907 = vadd.f32 0.0, %v1906
        %v1908 = vpop.f32.mrb[0].mxu0
        %v1909 = vpop.f32.mrb[0].mxu0
        %v1910 = vadd.f32 0.0, %v1909
        %v1911 = vpop.f32.mrb[0].mxu0
        %1912 = vmatprep.mubr.bf16.mxu0 0
        %1913 = vmatmul.mubr.bf16.gmra.mrb[0].mxu0 %v1819
        %v1914 = vpop.f32.mrb[0].mxu0
        %v1915 = vadd.f32 0.0, %v1914
        %v1916 = vpop.f32.mrb[0].mxu0
        %v1917 = vpop.f32.mrb[0].mxu0
        %v1918 = vadd.f32 0.0, %v1917
        %v1919 = vpop.f32.mrb[0].mxu0
        %1920 = vdwg.mxu0
        %v1921 = vadd.f32 %v1799, %v1859
        %v1922 = vadd.f32 %v1800, %v1862
        %v1923 = vadd.f32 %v1801, %v1867
        %v1924 = vadd.f32 %v1802, %v1870
        %v1925 = vadd.f32 %v1803, %v1875
        %v1926 = vadd.f32 %v1804, %v1878
        %v1927 = vadd.f32 %v1805, %v1883
        %v1928 = vadd.f32 %v1806, %v1886
        %v1929 = vadd.f32 %v1807, %v1891
        %v1930 = vadd.f32 %v1808, %v1894
        %v1931 = vadd.f32 %v1809, %v1899
        %v1932 = vadd.f32 %v1810, %v1902
        %v1933 = vadd.f32 %v1811, %v1907
        %v1934 = vadd.f32 %v1812, %v1910
        %v1935 = vadd.f32 %v1813, %v1915
        %v1936 = vadd.f32 %v1814, %v1918
        %v1937 = vpack.c.bf16 %v887, %v886
        %s1938 = scalar_lea.vmem %s5, 14
        %v1939 = vld [vmem:[%s1938] sm:$0x3]
        %v1941 = vsel %vm1049, %v1937, 0
        %v1944 = vsel %vm1074, %v1939, 0
        %1946 = vmatprep.subr.bf16.mxu0 0
        %1947 = vmatpush1.bf16.msra.mxu0 %v1944
        %1948 = vmatprep.subr.bf16.mxu0 0
        %1949 = vmatpush1.bf16.msra.mxu0 0
        %1950 = vmatprep.subr.bf16.mxu0 0
        %1951 = vmatpush1.bf16.msra.mxu0 0
        %1952 = vmatprep.subr.bf16.mxu0 0
        %1953 = vmatpush1.bf16.msra.mxu0 0
        %1954 = vmatprep.subr.bf16.mxu0 0
        %1955 = vmatpush1.bf16.msra.mxu0 0
        %1956 = vmatprep.subr.bf16.mxu0 0
        %1957 = vmatpush1.bf16.msra.mxu0 0
        %1958 = vmatprep.subr.bf16.mxu0 0
        %1959 = vmatpush1.bf16.msra.mxu0 0
        %1960 = vmatprep.subr.bf16.mxu0 0
        %1961 = vmatpush1.bf16.msra.mxu0 0
        %1962 = vmatprep.subr.bf16.mxu0 0
        %1963 = vmatpush1.bf16.msra.mxu0 0
        %1964 = vmatprep.subr.bf16.mxu0 0
        %1965 = vmatpush1.bf16.msra.mxu0 0
        %1966 = vmatprep.subr.bf16.mxu0 0
        %1967 = vmatpush1.bf16.msra.mxu0 0
        %1968 = vmatprep.subr.bf16.mxu0 0
        %1969 = vmatpush1.bf16.msra.mxu0 0
        %1970 = vmatprep.subr.bf16.mxu0 0
        %1971 = vmatpush1.bf16.msra.mxu0 0
        %1972 = vmatprep.subr.bf16.mxu0 0
        %1973 = vmatpush1.bf16.msra.mxu0 0
        %1974 = vmatprep.subr.bf16.mxu0 0
        %1975 = vmatpush1.bf16.msra.mxu0 0
        %1976 = vmatprep.subr.bf16.mxu0 0
        %1977 = vmatpush1.bf16.msra.mxu0 0
        %1978 = vmatprep.mubr.bf16.mxu0 0
        %1979 = vmatmul.mubr.bf16.gmra.mrb[0].mxu0 %v1057
        %v1980 = vpop.f32.mrb[0].mxu0
        %v1981 = vadd.f32 0.0, %v1980
        %v1982 = vpop.f32.mrb[0].mxu0
        %v1983 = vpop.f32.mrb[0].mxu0
        %v1984 = vadd.f32 0.0, %v1983
        %v1985 = vpop.f32.mrb[0].mxu0
        %1986 = vmatprep.mubr.bf16.mxu0 0
        %1987 = vmatmul.mubr.bf16.gmra.mrb[0].mxu0 %v1060
        %v1988 = vpop.f32.mrb[0].mxu0
        %v1989 = vadd.f32 0.0, %v1988
        %v1990 = vpop.f32.mrb[0].mxu0
        %v1991 = vpop.f32.mrb[0].mxu0
        %v1992 = vadd.f32 0.0, %v1991
        %v1993 = vpop.f32.mrb[0].mxu0
        %1994 = vmatprep.mubr.bf16.mxu0 0
        %1995 = vmatmul.mubr.bf16.gmra.mrb[0].mxu0 %v1063
        %v1996 = vpop.f32.mrb[0].mxu0
        %v1997 = vadd.f32 0.0, %v1996
        %v1998 = vpop.f32.mrb[0].mxu0
        %v1999 = vpop.f32.mrb[0].mxu0
        %v2000 = vadd.f32 0.0, %v1999
        %v2001 = vpop.f32.mrb[0].mxu0
        %2002 = vmatprep.mubr.bf16.mxu0 0
        %2003 = vmatmul.mubr.bf16.gmra.mrb[0].mxu0 %v1066
        %v2004 = vpop.f32.mrb[0].mxu0
        %v2005 = vadd.f32 0.0, %v2004
        %v2006 = vpop.f32.mrb[0].mxu0
        %v2007 = vpop.f32.mrb[0].mxu0
        %v2008 = vadd.f32 0.0, %v2007
        %v2009 = vpop.f32.mrb[0].mxu0
        %2010 = vmatprep.mubr.bf16.mxu0 0
        %2011 = vmatmul.mubr.bf16.gmra.mrb[0].mxu0 %v1069
        %v2012 = vpop.f32.mrb[0].mxu0
        %v2013 = vadd.f32 0.0, %v2012
        %v2014 = vpop.f32.mrb[0].mxu0
        %v2015 = vpop.f32.mrb[0].mxu0
        %v2016 = vadd.f32 0.0, %v2015
        %v2017 = vpop.f32.mrb[0].mxu0
        %2018 = vmatprep.mubr.bf16.mxu0 0
        %2019 = vmatmul.mubr.bf16.gmra.mrb[0].mxu0 %v1072
        %v2020 = vpop.f32.mrb[0].mxu0
        %v2021 = vadd.f32 0.0, %v2020
        %v2022 = vpop.f32.mrb[0].mxu0
        %v2023 = vpop.f32.mrb[0].mxu0
        %v2024 = vadd.f32 0.0, %v2023
        %v2025 = vpop.f32.mrb[0].mxu0
        %2026 = vmatprep.mubr.bf16.mxu0 0
        %2027 = vmatmul.mubr.bf16.gmra.mrb[0].mxu0 %v1575
        %v2028 = vpop.f32.mrb[0].mxu0
        %v2029 = vadd.f32 0.0, %v2028
        %v2030 = vpop.f32.mrb[0].mxu0
        %v2031 = vpop.f32.mrb[0].mxu0
        %v2032 = vadd.f32 0.0, %v2031
        %v2033 = vpop.f32.mrb[0].mxu0
        %2034 = vmatprep.mubr.bf16.mxu0 0
        %2035 = vmatmul.mubr.bf16.gmra.mrb[0].mxu0 %v1941
        %v2036 = vpop.f32.mrb[0].mxu0
        %v2037 = vadd.f32 0.0, %v2036
        %v2038 = vpop.f32.mrb[0].mxu0
        %v2039 = vpop.f32.mrb[0].mxu0
        %v2040 = vadd.f32 0.0, %v2039
        %v2041 = vpop.f32.mrb[0].mxu0
        %2042 = vdwg.mxu0
        %v2043 = vadd.f32 %v1921, %v1981
        %v2044 = vadd.f32 %v1922, %v1984
        %v2045 = vadd.f32 %v1923, %v1989
        %v2046 = vadd.f32 %v1924, %v1992
        %v2047 = vadd.f32 %v1925, %v1997
        %v2048 = vadd.f32 %v1926, %v2000
        %v2049 = vadd.f32 %v1927, %v2005
        %v2050 = vadd.f32 %v1928, %v2008
        %v2051 = vadd.f32 %v1929, %v2013
        %v2052 = vadd.f32 %v1930, %v2016
        %v2053 = vadd.f32 %v1931, %v2021
        %v2054 = vadd.f32 %v1932, %v2024
        %v2055 = vadd.f32 %v1933, %v2029
        %v2056 = vadd.f32 %v1934, %v2032
        %v2057 = vadd.f32 %v1935, %v2037
        %v2058 = vadd.f32 %v1936, %v2040
        %v2059 = vpack.c.bf16 %v1029, %v999
        %s2060 = scalar_lea.vmem %s5, 16
        %v2061 = vld [vmem:[%s2060] sm:$0x3]
        %v2063 = vsel %vm1049, %v2059, 0
        %v2066 = vsel %vm1074, %v2061, 0
        %2068 = vmatprep.subr.bf16.mxu0 0
        %2069 = vmatpush1.bf16.msra.mxu0 %v2066
        %2070 = vmatprep.subr.bf16.mxu0 0
        %2071 = vmatpush1.bf16.msra.mxu0 0
        %2072 = vmatprep.subr.bf16.mxu0 0
        %2073 = vmatpush1.bf16.msra.mxu0 0
        %2074 = vmatprep.subr.bf16.mxu0 0
        %2075 = vmatpush1.bf16.msra.mxu0 0
        %2076 = vmatprep.subr.bf16.mxu0 0
        %2077 = vmatpush1.bf16.msra.mxu0 0
        %2078 = vmatprep.subr.bf16.mxu0 0
        %2079 = vmatpush1.bf16.msra.mxu0 0
        %2080 = vmatprep.subr.bf16.mxu0 0
        %2081 = vmatpush1.bf16.msra.mxu0 0
        %2082 = vmatprep.subr.bf16.mxu0 0
        %2083 = vmatpush1.bf16.msra.mxu0 0
        %2084 = vmatprep.subr.bf16.mxu0 0
        %2085 = vmatpush1.bf16.msra.mxu0 0
        %2086 = vmatprep.subr.bf16.mxu0 0
        %2087 = vmatpush1.bf16.msra.mxu0 0
        %2088 = vmatprep.subr.bf16.mxu0 0
        %2089 = vmatpush1.bf16.msra.mxu0 0
        %2090 = vmatprep.subr.bf16.mxu0 0
        %2091 = vmatpush1.bf16.msra.mxu0 0
        %2092 = vmatprep.subr.bf16.mxu0 0
        %2093 = vmatpush1.bf16.msra.mxu0 0
        %2094 = vmatprep.subr.bf16.mxu0 0
        %2095 = vmatpush1.bf16.msra.mxu0 0
        %2096 = vmatprep.subr.bf16.mxu0 0
        %2097 = vmatpush1.bf16.msra.mxu0 0
        %2098 = vmatprep.subr.bf16.mxu0 0
        %2099 = vmatpush1.bf16.msra.mxu0 0
        %2100 = vmatprep.mubr.bf16.mxu0 0
        %2101 = vmatmul.mubr.bf16.gmra.mrb[0].mxu0 %v1316
        %v2102 = vpop.f32.mrb[0].mxu0
        %v2103 = vadd.f32 0.0, %v2102
        %v2104 = vpop.f32.mrb[0].mxu0
        %v2105 = vpop.f32.mrb[0].mxu0
        %v2106 = vadd.f32 0.0, %v2105
        %v2107 = vpop.f32.mrb[0].mxu0
        %2108 = vmatprep.mubr.bf16.mxu0 0
        %2109 = vmatmul.mubr.bf16.gmra.mrb[0].mxu0 %v1319
        %v2110 = vpop.f32.mrb[0].mxu0
        %v2111 = vadd.f32 0.0, %v2110
        %v2112 = vpop.f32.mrb[0].mxu0
        %v2113 = vpop.f32.mrb[0].mxu0
        %v2114 = vadd.f32 0.0, %v2113
        %v2115 = vpop.f32.mrb[0].mxu0
        %2116 = vmatprep.mubr.bf16.mxu0 0
        %2117 = vmatmul.mubr.bf16.gmra.mrb[0].mxu0 %v1322
        %v2118 = vpop.f32.mrb[0].mxu0
        %v2119 = vadd.f32 0.0, %v2118
        %v2120 = vpop.f32.mrb[0].mxu0
        %v2121 = vpop.f32.mrb[0].mxu0
        %v2122 = vadd.f32 0.0, %v2121
        %v2123 = vpop.f32.mrb[0].mxu0
        %2124 = vmatprep.mubr.bf16.mxu0 0
        %2125 = vmatmul.mubr.bf16.gmra.mrb[0].mxu0 %v1325
        %v2126 = vpop.f32.mrb[0].mxu0
        %v2127 = vadd.f32 0.0, %v2126
        %v2128 = vpop.f32.mrb[0].mxu0
        %v2129 = vpop.f32.mrb[0].mxu0
        %v2130 = vadd.f32 0.0, %v2129
        %v2131 = vpop.f32.mrb[0].mxu0
        %2132 = vmatprep.mubr.bf16.mxu0 0
        %2133 = vmatmul.mubr.bf16.gmra.mrb[0].mxu0 %v1328
        %v2134 = vpop.f32.mrb[0].mxu0
        %v2135 = vadd.f32 0.0, %v2134
        %v2136 = vpop.f32.mrb[0].mxu0
        %v2137 = vpop.f32.mrb[0].mxu0
        %v2138 = vadd.f32 0.0, %v2137
        %v2139 = vpop.f32.mrb[0].mxu0
        %2140 = vmatprep.mubr.bf16.mxu0 0
        %2141 = vmatmul.mubr.bf16.gmra.mrb[0].mxu0 %v1331
        %v2142 = vpop.f32.mrb[0].mxu0
        %v2143 = vadd.f32 0.0, %v2142
        %v2144 = vpop.f32.mrb[0].mxu0
        %v2145 = vpop.f32.mrb[0].mxu0
        %v2146 = vadd.f32 0.0, %v2145
        %v2147 = vpop.f32.mrb[0].mxu0
        %2148 = vmatprep.mubr.bf16.mxu0 0
        %2149 = vmatmul.mubr.bf16.gmra.mrb[0].mxu0 %v1697
        %v2150 = vpop.f32.mrb[0].mxu0
        %v2151 = vadd.f32 0.0, %v2150
        %v2152 = vpop.f32.mrb[0].mxu0
        %v2153 = vpop.f32.mrb[0].mxu0
        %v2154 = vadd.f32 0.0, %v2153
        %v2155 = vpop.f32.mrb[0].mxu0
        %2156 = vmatprep.mubr.bf16.mxu0 0
        %2157 = vmatmul.mubr.bf16.gmra.mrb[0].mxu0 %v2063
        %v2158 = vpop.f32.mrb[0].mxu0
        %v2159 = vadd.f32 0.0, %v2158
        %v2160 = vpop.f32.mrb[0].mxu0
        %v2161 = vpop.f32.mrb[0].mxu0
        %v2162 = vadd.f32 0.0, %v2161
        %v2163 = vpop.f32.mrb[0].mxu0
        %2164 = vdwg.mxu0
        %v2165 = vadd.f32 %v2043, %v2103
        %v2166 = vadd.f32 %v2044, %v2106
        %v2167 = vadd.f32 %v2045, %v2111
        %v2168 = vadd.f32 %v2046, %v2114
        %v2169 = vadd.f32 %v2047, %v2119
        %v2170 = vadd.f32 %v2048, %v2122
        %v2171 = vadd.f32 %v2049, %v2127
        %v2172 = vadd.f32 %v2050, %v2130
        %v2173 = vadd.f32 %v2051, %v2135
        %v2174 = vadd.f32 %v2052, %v2138
        %v2175 = vadd.f32 %v2053, %v2143
        %v2176 = vadd.f32 %v2054, %v2146
        %v2177 = vadd.f32 %v2055, %v2151
        %v2178 = vadd.f32 %v2056, %v2154
        %v2179 = vadd.f32 %v2057, %v2159
        %v2180 = vadd.f32 %v2058, %v2162
        %v2181 = vld [vmem:[%s6] sm:$0x1]
        %v2183 = vlaneseq
        %v2184 = vshrl.u32 %v2183, 7
        %v2185 = vsub.s32 0, %v2184
        %v2186 = vrot.slane %v2181, %v2185
        %v2188 = vadd.f32 %v2165, %v2186
        %v2189 = vadd.f32 %v2166, %v2186
        %v2190 = vadd.f32 %v2167, %v2186
        %v2191 = vadd.f32 %v2168, %v2186
        %v2192 = vadd.f32 %v2169, %v2186
        %v2193 = vadd.f32 %v2170, %v2186
        %v2194 = vadd.f32 %v2171, %v2186
        %v2195 = vadd.f32 %v2172, %v2186
        %v2196 = vadd.f32 %v2173, %v2186
        %v2197 = vadd.f32 %v2174, %v2186
        %v2198 = vadd.f32 %v2175, %v2186
        %v2199 = vadd.f32 %v2176, %v2186
        %v2200 = vadd.f32 %v2177, %v2186
        %v2201 = vadd.f32 %v2178, %v2186
        %v2202 = vadd.f32 %v2179, %v2186
        %v2203 = vadd.f32 %v2180, %v2186
        %v2204 = vmax.f32 %v2188, 0.0
        %v2205 = vmax.f32 %v2189, 0.0
        %v2206 = vmax.f32 %v2190, 0.0
        %v2207 = vmax.f32 %v2191, 0.0
        %v2208 = vmax.f32 %v2192, 0.0
        %v2209 = vmax.f32 %v2193, 0.0
        %v2210 = vmax.f32 %v2194, 0.0
        %v2211 = vmax.f32 %v2195, 0.0
        %v2212 = vmax.f32 %v2196, 0.0
        %v2213 = vmax.f32 %v2197, 0.0
        %v2214 = vmax.f32 %v2198, 0.0
        %v2215 = vmax.f32 %v2199, 0.0
        %v2216 = vmax.f32 %v2200, 0.0
        %v2217 = vmax.f32 %v2201, 0.0
        %v2218 = vmax.f32 %v2202, 0.0
        %v2219 = vmax.f32 %v2203, 0.0
        %v2220 = vpack.c.bf16 %v2205, %v2204
        %v2221 = vpack.c.bf16 %v2207, %v2206
        %v2222 = vpack.c.bf16 %v2209, %v2208
        %v2223 = vpack.c.bf16 %v2211, %v2210
        %v2224 = vpack.c.bf16 %v2213, %v2212
        %v2225 = vpack.c.bf16 %v2215, %v2214
        %v2226 = vpack.c.bf16 %v2217, %v2216
        %v2227 = vpack.c.bf16 %v2219, %v2218
        %v2228 = vld [vmem:[%s7] sm:$0x3]
        %v2229 = vld [vmem:[%s8] sm:$0x1]
        %v2231 = vlaneseq
        %v2232 = vshrl.u32 %v2231, 7
        %v2233 = vsub.s32 0, %v2232
        %v2234 = vrot.slane %v2229, %v2233
        %v2237 = vsel %vm1049, %v2220, 0
        %v2240 = vsel %vm1049, %v2221, 0
        %v2243 = vsel %vm1049, %v2222, 0
        %v2246 = vsel %vm1049, %v2223, 0
        %v2249 = vsel %vm1049, %v2224, 0
        %v2252 = vsel %vm1049, %v2225, 0
        %v2255 = vsel %vm1049, %v2226, 0
        %v2258 = vsel %vm1049, %v2227, 0
        %v2261 = vsel %vm1074, %v2228, 0
        %2263 = vmatprep.subr.bf16.mxu0 0
        %2264 = vmatpush1.bf16.msra.mxu0 %v2261
        %2265 = vmatprep.subr.bf16.mxu0 0
        %2266 = vmatpush1.bf16.msra.mxu0 0
        %2267 = vmatprep.subr.bf16.mxu0 0
        %2268 = vmatpush1.bf16.msra.mxu0 0
        %2269 = vmatprep.subr.bf16.mxu0 0
        %2270 = vmatpush1.bf16.msra.mxu0 0
        %2271 = vmatprep.subr.bf16.mxu0 0
        %2272 = vmatpush1.bf16.msra.mxu0 0
        %2273 = vmatprep.subr.bf16.mxu0 0
        %2274 = vmatpush1.bf16.msra.mxu0 0
        %2275 = vmatprep.subr.bf16.mxu0 0
        %2276 = vmatpush1.bf16.msra.mxu0 0
        %2277 = vmatprep.subr.bf16.mxu0 0
        %2278 = vmatpush1.bf16.msra.mxu0 0
        %2279 = vmatprep.subr.bf16.mxu0 0
        %2280 = vmatpush1.bf16.msra.mxu0 0
        %2281 = vmatprep.subr.bf16.mxu0 0
        %2282 = vmatpush1.bf16.msra.mxu0 0
        %2283 = vmatprep.subr.bf16.mxu0 0
        %2284 = vmatpush1.bf16.msra.mxu0 0
        %2285 = vmatprep.subr.bf16.mxu0 0
        %2286 = vmatpush1.bf16.msra.mxu0 0
        %2287 = vmatprep.subr.bf16.mxu0 0
        %2288 = vmatpush1.bf16.msra.mxu0 0
        %2289 = vmatprep.subr.bf16.mxu0 0
        %2290 = vmatpush1.bf16.msra.mxu0 0
        %2291 = vmatprep.subr.bf16.mxu0 0
        %2292 = vmatpush1.bf16.msra.mxu0 0
        %2293 = vmatprep.subr.bf16.mxu0 0
        %2294 = vmatpush1.bf16.msra.mxu0 0
        %2295 = vmatprep.mubr.bf16.mxu0 0
        %2296 = vmatmul.mubr.bf16.gmra.mrb[0].mxu0 %v2237
        %v2297 = vpop.f32.mrb[0].mxu0
        %v2298 = vadd.f32 %v2234, %v2297
        %v2299 = vpop.f32.mrb[0].mxu0
        %v2300 = vpop.f32.mrb[0].mxu0
        %v2301 = vadd.f32 %v2234, %v2300
        %v2302 = vpop.f32.mrb[0].mxu0
        %2303 = vmatprep.mubr.bf16.mxu0 0
        %2304 = vmatmul.mubr.bf16.gmra.mrb[0].mxu0 %v2240
        %v2305 = vpop.f32.mrb[0].mxu0
        %v2306 = vadd.f32 %v2234, %v2305
        %v2307 = vpop.f32.mrb[0].mxu0
        %v2308 = vpop.f32.mrb[0].mxu0
        %v2309 = vadd.f32 %v2234, %v2308
        %v2310 = vpop.f32.mrb[0].mxu0
        %2311 = vmatprep.mubr.bf16.mxu0 0
        %2312 = vmatmul.mubr.bf16.gmra.mrb[0].mxu0 %v2243
        %v2313 = vpop.f32.mrb[0].mxu0
        %v2314 = vadd.f32 %v2234, %v2313
        %v2315 = vpop.f32.mrb[0].mxu0
        %v2316 = vpop.f32.mrb[0].mxu0
        %v2317 = vadd.f32 %v2234, %v2316
        %v2318 = vpop.f32.mrb[0].mxu0
        %2319 = vmatprep.mubr.bf16.mxu0 0
        %2320 = vmatmul.mubr.bf16.gmra.mrb[0].mxu0 %v2246
        %v2321 = vpop.f32.mrb[0].mxu0
        %v2322 = vadd.f32 %v2234, %v2321
        %v2323 = vpop.f32.mrb[0].mxu0
        %v2324 = vpop.f32.mrb[0].mxu0
        %v2325 = vadd.f32 %v2234, %v2324
        %v2326 = vpop.f32.mrb[0].mxu0
        %2327 = vmatprep.mubr.bf16.mxu0 0
        %2328 = vmatmul.mubr.bf16.gmra.mrb[0].mxu0 %v2249
        %v2329 = vpop.f32.mrb[0].mxu0
        %v2330 = vadd.f32 %v2234, %v2329
        %v2331 = vpop.f32.mrb[0].mxu0
        %v2332 = vpop.f32.mrb[0].mxu0
        %v2333 = vadd.f32 %v2234, %v2332
        %v2334 = vpop.f32.mrb[0].mxu0
        %2335 = vmatprep.mubr.bf16.mxu0 0
        %2336 = vmatmul.mubr.bf16.gmra.mrb[0].mxu0 %v2252
        %v2337 = vpop.f32.mrb[0].mxu0
        %v2338 = vadd.f32 %v2234, %v2337
        %v2339 = vpop.f32.mrb[0].mxu0
        %v2340 = vpop.f32.mrb[0].mxu0
        %v2341 = vadd.f32 %v2234, %v2340
        %v2342 = vpop.f32.mrb[0].mxu0
        %2343 = vmatprep.mubr.bf16.mxu0 0
        %2344 = vmatmul.mubr.bf16.gmra.mrb[0].mxu0 %v2255
        %v2345 = vpop.f32.mrb[0].mxu0
        %v2346 = vadd.f32 %v2234, %v2345
        %v2347 = vpop.f32.mrb[0].mxu0
        %v2348 = vpop.f32.mrb[0].mxu0
        %v2349 = vadd.f32 %v2234, %v2348
        %v2350 = vpop.f32.mrb[0].mxu0
        %2351 = vmatprep.mubr.bf16.mxu0 0
        %2352 = vmatmul.mubr.bf16.gmra.mrb[0].mxu0 %v2258
        %v2353 = vpop.f32.mrb[0].mxu0
        %v2354 = vadd.f32 %v2234, %v2353
        %v2355 = vpop.f32.mrb[0].mxu0
        %v2356 = vpop.f32.mrb[0].mxu0
        %v2357 = vadd.f32 %v2234, %v2356
        %v2358 = vpop.f32.mrb[0].mxu0
        %2359 = vdwg.mxu0
        %v2360 = vadd.f32 %v2298, %v494
        %v2361 = vadd.f32 %v2301, %v495
        %v2362 = vadd.f32 %v2306, %v496
        %v2363 = vadd.f32 %v2309, %v497
        %v2364 = vadd.f32 %v2314, %v498
        %v2365 = vadd.f32 %v2317, %v499
        %v2366 = vadd.f32 %v2322, %v500
        %v2367 = vadd.f32 %v2325, %v501
        %v2368 = vadd.f32 %v2330, %v502
        %v2369 = vadd.f32 %v2333, %v503
        %v2370 = vadd.f32 %v2338, %v504
        %v2371 = vadd.f32 %v2341, %v505
        %v2372 = vadd.f32 %v2346, %v506
        %v2373 = vadd.f32 %v2349, %v507
        %v2374 = vadd.f32 %v2354, %v508
        %v2375 = vadd.f32 %v2357, %v509
        %v2376 = vmax.f32 %v2360, 0.0
        %v2377 = vmax.f32 %v2361, 0.0
        %v2378 = vmax.f32 %v2362, 0.0
        %v2379 = vmax.f32 %v2363, 0.0
        %v2380 = vmax.f32 %v2364, 0.0
        %v2381 = vmax.f32 %v2365, 0.0
        %v2382 = vmax.f32 %v2366, 0.0
        %v2383 = vmax.f32 %v2367, 0.0
        %v2384 = vmax.f32 %v2368, 0.0
        %v2385 = vmax.f32 %v2369, 0.0
        %v2386 = vmax.f32 %v2370, 0.0
        %v2387 = vmax.f32 %v2371, 0.0
        %v2388 = vmax.f32 %v2372, 0.0
        %v2389 = vmax.f32 %v2373, 0.0
        %v2390 = vmax.f32 %v2374, 0.0
        %v2391 = vmax.f32 %v2375, 0.0
        %2392 = vst.msk [vmem:[%s478] sm:$0xff] %vm537, %v2376
        %2393 = vst.msk [vmem:[%s478 + $0x8] sm:$0xff] %vm537, %v2377
        %2394 = vst.msk [vmem:[%s478 + $0x10] sm:$0xff] %vm537, %v2378
        %2395 = vst.msk [vmem:[%s478 + $0x18] sm:$0xff] %vm537, %v2379
        %2396 = vst.msk [vmem:[%s478 + $0x20] sm:$0xff] %vm537, %v2380
        %2397 = vst.msk [vmem:[%s478 + $0x28] sm:$0xff] %vm537, %v2381
        %2398 = vst.msk [vmem:[%s478 + $0x30] sm:$0xff] %vm537, %v2382
        %2399 = vst.msk [vmem:[%s478 + $0x38] sm:$0xff] %vm537, %v2383
        %2400 = vst.msk [vmem:[%s478 + $0x40] sm:$0xff] %vm537, %v2384
        %2401 = vst.msk [vmem:[%s478 + $0x48] sm:$0xff] %vm537, %v2385
        %2402 = vst.msk [vmem:[%s478 + $0x50] sm:$0xff] %vm537, %v2386
        %2403 = vst.msk [vmem:[%s478 + $0x58] sm:$0xff] %vm537, %v2387
        %2404 = vst.msk [vmem:[%s478 + $0x60] sm:$0xff] %vm537, %v2388
        %2405 = vst.msk [vmem:[%s478 + $0x68] sm:$0xff] %vm537, %v2389
        %2406 = vst.msk [vmem:[%s478 + $0x70] sm:$0xff] %vm537, %v2390
        %2407 = vst.msk [vmem:[%s478 + $0x78] sm:$0xff] %vm537, %v2391
        %s2408 = sand.u32 %s277, 1
        %s2409 = scalar_lea.sflag [#allocation4], %s2408
        %s2410 = sand.u32 %s277, 1
        %s2411 = smul.addr %s2410, 128
        %s2412 = scalar_lea.vmem [#allocation8], %s2411
        // Predicated region
        $region69: #{bottleneck_nhwc.1} parent=55 // pred_check
          %p2413 = pneg %p287
        $region70: #{bottleneck_nhwc.1} parent=55 // pred_check_branch
          %2415 = sbr.rel (%p2413) target = $region72
        $region71: #{bottleneck_nhwc.1} parent=55 // pred_region
          %s2416 = smul.u32 8, %s34
          %s2418 = ssub.s32 2048, 2048
          %2419 = vsyncadd %s2409, %s2418
          %s2420 = smul.addr %s2416, 2
          %s2421 = smul.addr %s33, 32
          %s2422 = sadd.s32 %s2420, %s2421
          %s2423 = smul.addr %s2422, 128
          %s2424 = scalar_lea.hbm %s9, %s2423
          %s2425 = sshll.u32 %s2412, 4
          %s2426 = int_to_ptr.vmem [resolvable:$true] %s2425
          %2431 = dma.vmem_to_hbm [thread:$0]  %s2426, 2048, %s2424, %s2409, 128, 128, 8
        $region72: #{bottleneck_nhwc.1} parent=55 // pred_fallthru
          _
      $region56: #{bottleneck_nhwc.1} parent=5 // pred_fallthru
        _
      %p2432 = scmp.le.s32.totalorder 2, %s24
      // Predicated region
      $region73: #{bottleneck_nhwc.1} parent=5 // pred_check
        %p2433 = pneg %p2432
      $region74: #{bottleneck_nhwc.1} parent=5 // pred_check_branch
        %2435 = sbr.rel (%p2433) target = $region76
      $region75: #{bottleneck_nhwc.1} parent=5 // pred_region
        %s2436 = ssub.s32 %s24, 2
        // Predicated region
        $region77: #{bottleneck_nhwc.1} parent=75 // pred_check
          %p2437 = pneg %p293
        $region78: #{bottleneck_nhwc.1} parent=75 // pred_check_branch
          %2439 = sbr.rel (%p2437) target = $region80
        $region79: #{bottleneck_nhwc.1} parent=75 // pred_region
          %s2440 = sand.u32 %s278, 1
          %s2441 = scalar_lea.sflag [#allocation4], %s2440
          %s2442 = sand.u32 %s278, 1
          %s2443 = smul.addr %s2442, 128
          %s2444 = scalar_lea.vmem [#allocation8], %s2443
          %2445 = dma.done %s2441, 2048
        $region80: #{bottleneck_nhwc.1} parent=75 // pred_fallthru
          _
      $region76: #{bottleneck_nhwc.1} parent=5 // pred_fallthru
        _
    $region6: #{bottleneck_nhwc.1} parent=1 // loop_footer
      %s28 = sadd.s32 1, %s24
    $region7: #{bottleneck_nhwc.1} parent=1 // loop_footer_branch
      %23 = sbr.rel target = $region3
    $region8: #{bottleneck_nhwc.1} parent=1 // loop_exit
      _
    %2446 = vsyncpa [#allocation3], 1
    %s2447 = scalar_lea.sflag [#allocation3], 1
    %2448 = vsyncpa %s2447, 1
    %2449 = vsyncpa [#allocation6], 1
    %s2450 = scalar_lea.sflag [#allocation6], 1
    %2451 = vsyncpa %s2450, 1
    %2452 = vsyncpa [#allocation4], 1
    %s2453 = scalar_lea.sflag [#allocation4], 1
    %2454 = vsyncpa %s2453, 1

</llo_original>
